<compile_context>
chip_gen: v5e
topology: v5e:2x2
jax: 0.10.0
libtpu: 0.0.40
codegen_flags: <defaults>
</compile_context>

<pallas_src>
import jax
import jax.numpy as jnp
from jax.experimental import pallas as pl
from jax.experimental.pallas import tpu as pltpu

N_SOURCE_NODES = 8   # small test size (real IMAN uses 35); everything is parametric in N


def _round_up(v, m):
    return ((v + m - 1) // m) * m


# ----------------------------------------------------------------------------
# Fused Pallas kernel (one grid step == one graph):
#   conv1+BN1+sig -> conv2+BN2+sig -> conv3+BN3+sig -> skip average
# ----------------------------------------------------------------------------
def _aligner_fused_kernel(x_ref, ae_ref, mnt_ref, wb_ref, rt_ref, aff_ref, out_ref):
    n_pad = x_ref.shape[0]          # padded node/channel count (multiple of 16)
    e_pad = ae_ref.shape[-1]        # padded edge count = n_pad**2 (multiple of 128)
    rep = e_pad // n_pad

    a_e = ae_ref[...][None, :, :]   # [1, 1, E_pad] dense edge attr, e = tgt*n_pad + src
    mn_t = mnt_ref[...]             # [E_pad, n_pad] mean-aggregation scatter (1/deg or 0)

    def nnconv_bn_sig(x, layer):
        # x: [cin(n_pad), node(n_pad)] channel-major.
        w = wb_ref[2 * layer]           # [cin, cout, 1]
        b = wb_ref[2 * layer + 1]       # [cin, cout, 1]
        root_t = rt_ref[layer]          # [cout, cin]   (BN scale pre-folded, transposed)
        scale = aff_ref[2 * layer]      # [cout, 1]     BN scale
        shift = aff_ref[2 * layer + 1]  # [cout, 1]     conv bias + BN shift, pre-folded
        # Per-edge message weights, lane-dense (E_pad on the lane axis):
        #   theta[cin, cout, e] = relu(a[e] * W[cin, cout] + B[cin, cout])
        # TODO(synk): for the real n=35 model on v5e/v7x chunk this over cin
        # (lax.fori_loop, unroll=True) so the [cin, cout, E_pad] intermediate fits scoped VMEM.
        theta = jnp.maximum(a_e * w + b, 0.0)                 # [cin, cout, E_pad]
        # Source-feature replication: single lane tile (no python concat, no gather matmul).
        xs = jnp.tile(x, (1, rep))                            # [cin, E_pad], xs[c,e]=x[c, e%n_pad]
        msg = jnp.sum(theta * xs[:, None, :], axis=0)         # [cout, E_pad]
        # Mean aggregation on the MXU (contracts the lane-dense edge axis; no transpose):
        aggr = jnp.dot(msg, mn_t, preferred_element_type=jnp.float32)    # [cout, n_pad]
        # Root-weight term on the MXU, channel-major:
        root = jnp.dot(root_t, x, preferred_element_type=jnp.float32)    # [cout, n_pad]
        return jax.nn.sigmoid(aggr * scale + root + shift)

    x0 = x_ref[...]                 # [n_pad(features), n_pad(nodes)]
    x1 = nnconv_bn_sig(x0, 0)       # conv1 + BN1 + sigmoid   (F.dropout eval -> identity)
    x2 = nnconv_bn_sig(x1, 1)       # conv2 + BN2 + sigmoid   (F.dropout eval -> identity)
    x3 = nnconv_bn_sig(x2, 2)       # conv3 + BN3 + sigmoid
    # (cat([x3, x1])[:, :N] + cat([x3, x1])[:, N:2N]) / 2 == (x3 + x1) / 2
    # (only valid because conv3.out_channels == conv1.out_channels == N, as in the module)
    out_ref[...] = (x3 + x1) * 0.5


@jax.jit
def aligner_forward(x_nodes, a_e, mn_t, wb, rt, aff):
    """Batched Aligner forward.  x_nodes: [B, n, n] node-major -> [B, n, n]."""
    B, n, _ = x_nodes.shape
    e_pad, n_pad = mn_t.shape[-2], mn_t.shape[-1]
    # Layout plumbing lives in the wrapper: channel-major + zero pad for the kernel.
    x_cm = jnp.zeros((B, n_pad, n_pad), jnp.float32).at[:, :n, :n].set(
        jnp.transpose(x_nodes, (0, 2, 1)))
    out_cm = pl.pallas_call(
        _aligner_fused_kernel,
        out_shape=jax.ShapeDtypeStruct((B, n_pad, n_pad), jnp.float32),
        grid=(B,),
        in_specs=[
            pl.BlockSpec((None, n_pad, n_pad), lambda bg: (bg, 0, 0)),    # x        (per graph)
            pl.BlockSpec((None, 1, e_pad), lambda bg: (bg, 0, 0)),        # a_e      (per graph)
            pl.BlockSpec((None, e_pad, n_pad), lambda bg: (bg, 0, 0)),    # mn_t     (per graph)
            pl.BlockSpec((6, n_pad, n_pad, 1), lambda bg: (0, 0, 0, 0)),  # W/B slab (resident)
            pl.BlockSpec((3, n_pad, n_pad), lambda bg: (0, 0, 0)),        # root slab
            pl.BlockSpec((6, n_pad, 1), lambda bg: (0, 0, 0)),            # scale/shift slab
        ],
        out_specs=pl.BlockSpec((None, n_pad, n_pad), lambda bg: (bg, 0, 0)),
        compiler_params=pltpu.CompilerParams(
            # graphs are independent -> both TensorCores on v7x; harmless on v5e/v6e
            dimension_semantics=("parallel",)),
    )(x_cm, a_e, mn_t, wb, rt, aff)
    return jnp.transpose(out_cm, (0, 2, 1))[:, :n, :n]


# ----------------------------------------------------------------------------
# Host-side precompute: dense padded graph structures + BN/bias folding + packing
# ----------------------------------------------------------------------------
def precompute_graph(edge_index, edge_attr, n, n_pad):
    """Dense, zero-padded graph structures (built once per graph, outside the jit).

    Returns:
      a_e  [1, E_pad]      dense edge attr, e = target*n_pad + source (0 elsewhere)
      mn_t [E_pad, n_pad]  mean-aggregation scatter: mn_t[e, i] = 1/deg(i) iff e is a real
                           edge into node i, else 0 (zeros mask padded edges / nodes).
    """
    e_pad = n_pad * n_pad
    src, dst = edge_index[0], edge_index[1]
    a = jnp.zeros((n_pad, n_pad), jnp.float32).at[dst, src].set(edge_attr[:, 0])
    m = jnp.zeros((n_pad, n_pad), jnp.float32).at[dst, src].set(1.0)
    deg = jnp.maximum(jnp.sum(m, axis=1), 1.0)        # mean over empty set -> 0 (PyG behavior)
    mn = m / deg[:, None]                             # [n_pad(target), n_pad(source)]
    tgt = jnp.arange(e_pad) // n_pad
    mn_t = jnp.zeros((e_pad, n_pad), jnp.float32).at[jnp.arange(e_pad), tgt].set(mn.reshape(-1))
    return a.reshape(1, e_pad), mn_t


def fold_layer(w, b, root, bias, gamma, beta, running_mean, running_var, n_pad, eps=1e-3):
    """Fold eval-mode BatchNorm (eps=1e-3, as set in the module) + conv bias, pad to n_pad.

    NOTE: w/b here are already in [cin, cout] ordering; when importing real PyG weights the
    Linear(1, cin*cout) output must be reshaped exactly like NNConv's
    `.view(-1, in_channels, out_channels)`.
    """
    cin, cout = w.shape
    scale = gamma / jnp.sqrt(running_var + eps)
    shift = beta - running_mean * scale
    z = lambda *s: jnp.zeros(s, jnp.float32)
    wp = z(n_pad, n_pad, 1).at[:cin, :cout, 0].set(w)
    bp = z(n_pad, n_pad, 1).at[:cin, :cout, 0].set(b)
    # Root weight stored transposed ([cout, cin]) for the channel-major dot, BN-scale folded.
    rtp = z(n_pad, n_pad).at[:cout, :cin].set((root * scale[None, :]).T)
    sc = z(n_pad, 1).at[:cout, 0].set(scale)
    sh = z(n_pad, 1).at[:cout, 0].set(bias * scale + shift)
    return wp, bp, rtp, sc, sh


def pack_layers(folded):
    wb = jnp.stack([m for (wp, bp, _, _, _) in folded for m in (wp, bp)])   # [6, n_pad, n_pad, 1]
    rt = jnp.stack([f[2] for f in folded])                                  # [3, n_pad, n_pad]
    aff = jnp.stack([m for f in folded for m in (f[3], f[4])])              # [6, n_pad, 1]
    return wb, rt, aff


def init_raw_layers(key, n):
    """Random raw parameters matching the module's three NNConv+BatchNorm layers."""
    dims = [(n, n), (n, 1), (1, n)]   # conv1: N->N, conv2: N->1, conv3: 1->N
    layers = []
    for li, (cin, cout) in enumerate(dims):
        ks = jax.random.split(jax.random.fold_in(key, li), 8)
        layers.append(dict(
            w=0.3 * jax.random.normal(ks[0], (cin, cout), jnp.float32),
            b=0.1 * jax.random.normal(ks[1], (cin, cout), jnp.float32),
            root=0.3 * jax.random.normal(ks[2], (cin, cout), jnp.float32),
            bias=0.1 * jax.random.normal(ks[3], (cout,), jnp.float32),
            gamma=1.0 + 0.1 * jax.random.normal(ks[4], (cout,), jnp.float32),
            beta=0.1 * jax.random.normal(ks[5], (cout,), jnp.float32),
            mean=0.1 * jax.random.normal(ks[6], (cout,), jnp.float32),
            var=jax.random.uniform(ks[7], (cout,), jnp.float32, 0.5, 1.5),
        ))
    return layers


# ----------------------------------------------------------------------------
# Pure-JAX edge-list reference (for correctness cross-check of the padded kernel)
# ----------------------------------------------------------------------------
def _nnconv_bn_sig_ref(x, edge_index, edge_attr, p, n, eps=1e-3):
    src, dst = edge_index[0], edge_index[1]
    theta = jax.nn.relu(edge_attr[:, :, None] * p['w'][None] + p['b'][None])   # [E, cin, cout]
    msgs = jnp.einsum('ec,eco->eo', x[src], theta)                             # [E, cout]
    ssum = jax.ops.segment_sum(msgs, dst, num_segments=n)
    cnt = jax.ops.segment_sum(jnp.ones((src.shape[0],), jnp.float32), dst, num_segments=n)
    aggr = ssum / jnp.maximum(cnt, 1.0)[:, None]
    conv = aggr + x @ p['root'] + p['bias'][None]
    bn = (conv - p['mean'][None]) / jnp.sqrt(p['var'][None] + eps) * p['gamma'][None] + p['beta'][None]
    return jax.nn.sigmoid(bn)


def aligner_reference(x, edge_index, edge_attr, layers, n):
    x1 = _nnconv_bn_sig_ref(x, edge_index, edge_attr, layers[0], n)
    x2 = _nnconv_bn_sig_ref(x1, edge_index, edge_attr, layers[1], n)
    x3 = _nnconv_bn_sig_ref(x2, edge_index, edge_attr, layers[2], n)
    return (x3 + x1) * 0.5


if __name__ == "__main__":
    n = N_SOURCE_NODES
    B = 4                                    # batch of independent graphs (grid axis)
    n_pad = max(_round_up(n, 16), 16)        # n_pad**2 % 128 == 0 -> lane-dense edge axis
    key = jax.random.PRNGKey(0)
    k_x, k_e, k_p = jax.random.split(key, 3)

    # Fully-connected directed graph without self-loops (IMAN-style), edge_attr in [0,1)
    idx = jnp.arange(n)
    src_all = jnp.repeat(idx, n)
    dst_all = jnp.tile(idx, n)
    keep = src_all != dst_all
    edge_index = jnp.stack([src_all[keep], dst_all[keep]])          # [2, E]
    E = edge_index.shape[1]

    # Node features: [B graphs, n nodes, n features]; per-graph edge attributes.
    x_nodes = jax.random.normal(k_x, (B, n, n), jnp.float32)
    edge_attr = jax.random.uniform(k_e, (B, E, 1), jnp.float32)

    # Hoisted host precompute (graph densification + parameter folding/packing), done once.
    a_list, m_list = [], []
    for bb in range(B):
        ae_b, mnt_b = precompute_graph(edge_index, edge_attr[bb], n, n_pad)
        a_list.append(ae_b)
        m_list.append(mnt_b)
    a_e = jnp.stack(a_list)      # [B, 1, E_pad]
    mn_t = jnp.stack(m_list)     # [B, E_pad, n_pad]

    raw = init_raw_layers(k_p, n)
    folded = [fold_layer(p['w'], p['b'], p['root'], p['bias'], p['gamma'], p['beta'],
                         p['mean'], p['var'], n_pad) for p in raw]
    wb, rt, aff = pack_layers(folded)

    out = aligner_forward(x_nodes, a_e, mn_t, wb, rt, aff)
    jax.block_until_ready(out)
    assert out.shape == (B, n, n)

    # Cross-check the fused/padded kernel against the edge-list reference.
    ref = jnp.stack([aligner_reference(x_nodes[bb], edge_index, edge_attr[bb], raw, n)
                     for bb in range(B)])
    max_err = float(jnp.max(jnp.abs(out - ref)))
    assert max_err < 1e-4, f"kernel vs reference mismatch: {max_err}"
    print("KERNEL_OK")
</pallas_src>

<mosaic_0001>
module attributes {stable_mosaic.version = 11 : i64} {
  func.func @_aligner_fused_kernel(%arg0: i32, %arg1: memref<1x16x16xf32, #tpu.memory_space<vmem>>, %arg2: memref<1x1x256xf32, #tpu.memory_space<vmem>>, %arg3: memref<1x256x16xf32, #tpu.memory_space<vmem>>, %arg4: memref<6x16x16x1xf32, #tpu.memory_space<vmem>>, %arg5: memref<3x16x16xf32, #tpu.memory_space<vmem>>, %arg6: memref<6x16x1xf32, #tpu.memory_space<vmem>>, %arg7: memref<1x16x16xf32, #tpu.memory_space<vmem>>) attributes {dimension_semantics = [#tpu.dimension_semantics<parallel>], iteration_bounds = array<i64: 4>, scalar_prefetch = 0 : i64, scratch_operands = 0 : i64, tpu.core_type = #tpu.core_type<tc>, window_params = [{transform_indices = @transform_0, window_bounds = array<i64: 1, 16, 16>}, {transform_indices = @transform_1, window_bounds = array<i64: 1, 1, 256>}, {transform_indices = @transform_2, window_bounds = array<i64: 1, 256, 16>}, {pipeline_mode = #tpu.pipeline_mode<synchronous>, transform_indices = @transform_3, window_bounds = array<i64: 6, 16, 16, 1>}, {pipeline_mode = #tpu.pipeline_mode<synchronous>, transform_indices = @transform_4, window_bounds = array<i64: 3, 16, 16>}, {pipeline_mode = #tpu.pipeline_mode<synchronous>, transform_indices = @transform_5, window_bounds = array<i64: 6, 16, 1>}, {transform_indices = @transform_6, window_bounds = array<i64: 1, 16, 16>}]} {
    %c0 = arith.constant 0 : index
    %c0_0 = arith.constant 0 : index
    %c0_1 = arith.constant 0 : index
    %0 = vector.load %arg2[%c0, %c0_0, %c0_1] : memref<1x1x256xf32, #tpu.memory_space<vmem>>, vector<1x1x256xf32>
    %1 = vector.shape_cast %0 : vector<1x1x256xf32> to vector<1x256xf32>
    %2 = vector.shape_cast %1 : vector<1x256xf32> to vector<1x1x256xf32>
    %c0_2 = arith.constant 0 : index
    %c0_3 = arith.constant 0 : index
    %c0_4 = arith.constant 0 : index
    %3 = vector.load %arg3[%c0_2, %c0_3, %c0_4] : memref<1x256x16xf32, #tpu.memory_space<vmem>>, vector<1x256x16xf32>
    %4 = vector.shape_cast %3 : vector<1x256x16xf32> to vector<256x16xf32>
    %c0_5 = arith.constant 0 : index
    %c0_6 = arith.constant 0 : index
    %c0_7 = arith.constant 0 : index
    %5 = vector.load %arg1[%c0_5, %c0_6, %c0_7] : memref<1x16x16xf32, #tpu.memory_space<vmem>>, vector<1x16x16xf32>
    %6 = vector.shape_cast %5 : vector<1x16x16xf32> to vector<16x16xf32>
    %c0_8 = arith.constant 0 : index
    %c0_9 = arith.constant 0 : index
    %c0_10 = arith.constant 0 : index
    %c0_11 = arith.constant 0 : index
    %7 = vector.load %arg4[%c0_8, %c0_9, %c0_10, %c0_11] : memref<6x16x16x1xf32, #tpu.memory_space<vmem>>, vector<1x16x16x1xf32>
    %8 = vector.shape_cast %7 : vector<1x16x16x1xf32> to vector<16x16x1xf32>
    %c1 = arith.constant 1 : index
    %c0_12 = arith.constant 0 : index
    %c0_13 = arith.constant 0 : index
    %c0_14 = arith.constant 0 : index
    %9 = vector.load %arg4[%c1, %c0_12, %c0_13, %c0_14] : memref<6x16x16x1xf32, #tpu.memory_space<vmem>>, vector<1x16x16x1xf32>
    %10 = vector.shape_cast %9 : vector<1x16x16x1xf32> to vector<16x16x1xf32>
    %c0_15 = arith.constant 0 : index
    %c0_16 = arith.constant 0 : index
    %c0_17 = arith.constant 0 : index
    %11 = vector.load %arg5[%c0_15, %c0_16, %c0_17] : memref<3x16x16xf32, #tpu.memory_space<vmem>>, vector<1x16x16xf32>
    %12 = vector.shape_cast %11 : vector<1x16x16xf32> to vector<16x16xf32>
    %c0_18 = arith.constant 0 : index
    %c0_19 = arith.constant 0 : index
    %c0_20 = arith.constant 0 : index
    %13 = vector.load %arg6[%c0_18, %c0_19, %c0_20] : memref<6x16x1xf32, #tpu.memory_space<vmem>>, vector<1x16x1xf32>
    %14 = vector.shape_cast %13 : vector<1x16x1xf32> to vector<16x1xf32>
    %c1_21 = arith.constant 1 : index
    %c0_22 = arith.constant 0 : index
    %c0_23 = arith.constant 0 : index
    %15 = vector.load %arg6[%c1_21, %c0_22, %c0_23] : memref<6x16x1xf32, #tpu.memory_space<vmem>>, vector<1x16x1xf32>
    %16 = vector.shape_cast %15 : vector<1x16x1xf32> to vector<16x1xf32>
    %17 = vector.broadcast %2 : vector<1x1x256xf32> to vector<16x16x256xf32>
    %18 = vector.broadcast %8 : vector<16x16x1xf32> to vector<16x16x256xf32>
    %19 = arith.mulf %17, %18 : vector<16x16x256xf32>
    %20 = vector.broadcast %10 : vector<16x16x1xf32> to vector<16x16x256xf32>
    %21 = arith.addf %19, %20 : vector<16x16x256xf32>
    %cst = arith.constant 0.000000e+00 : f32
    %22 = vector.broadcast %cst : f32 to vector<16x16x256xf32>
    %23 = arith.maximumf %21, %22 : vector<16x16x256xf32>
    %24 = tpu.concatenate %6, %6, %6, %6, %6, %6, %6, %6, %6, %6, %6, %6, %6, %6, %6, %6 in 1 : vector<16x16xf32>, vector<16x16xf32>, vector<16x16xf32>, vector<16x16xf32>, vector<16x16xf32>, vector<16x16xf32>, vector<16x16xf32>, vector<16x16xf32>, vector<16x16xf32>, vector<16x16xf32>, vector<16x16xf32>, vector<16x16xf32>, vector<16x16xf32>, vector<16x16xf32>, vector<16x16xf32>, vector<16x16xf32> -> vector<16x256xf32>
    %25 = vector.shape_cast %24 : vector<16x256xf32> to vector<16x1x256xf32>
    %26 = vector.broadcast %25 : vector<16x1x256xf32> to vector<16x16x256xf32>
    %27 = arith.mulf %23, %26 : vector<16x16x256xf32>
    %cst_24 = arith.constant dense<0.000000e+00> : vector<16x256xf32>
    %28 = vector.multi_reduction <add>, %27, %cst_24 [0] : vector<16x16x256xf32> to vector<16x256xf32>
    %cst_25 = arith.constant dense<0.000000e+00> : vector<16x16xf32>
    %29 = tpu.matmul %28, %4, %cst_25 {dimension_numbers = #tpu.dot_dimension_numbers<[1], [0], [0], [1], [0, 0, 1, 1], [], []>} : vector<16x256xf32>, vector<256x16xf32>, vector<16x16xf32> -> vector<16x16xf32>
    %cst_26 = arith.constant dense<0.000000e+00> : vector<16x16xf32>
    %30 = tpu.matmul %12, %6, %cst_26 {dimension_numbers = #tpu.dot_dimension_numbers<[1], [0], [0], [1], [0, 0, 1, 1], [], []>} : vector<16x16xf32>, vector<16x16xf32>, vector<16x16xf32> -> vector<16x16xf32>
    %31 = vector.broadcast %14 : vector<16x1xf32> to vector<16x16xf32>
    %32 = arith.mulf %29, %31 : vector<16x16xf32>
    %33 = arith.addf %32, %30 : vector<16x16xf32>
    %34 = vector.broadcast %16 : vector<16x1xf32> to vector<16x16xf32>
    %35 = arith.addf %33, %34 : vector<16x16xf32>
    %36 = arith.negf %35 : vector<16x16xf32>
    %37 = math.exp %36 : vector<16x16xf32>
    %cst_27 = arith.constant 1.000000e+00 : f32
    %38 = vector.broadcast %cst_27 : f32 to vector<16x16xf32>
    %39 = arith.addf %38, %37 : vector<16x16xf32>
    %40 = arith.divf %38, %39 : vector<16x16xf32>
    %c2 = arith.constant 2 : index
    %c0_28 = arith.constant 0 : index
    %c0_29 = arith.constant 0 : index
    %c0_30 = arith.constant 0 : index
    %41 = vector.load %arg4[%c2, %c0_28, %c0_29, %c0_30] : memref<6x16x16x1xf32, #tpu.memory_space<vmem>>, vector<1x16x16x1xf32>
    %42 = vector.shape_cast %41 : vector<1x16x16x1xf32> to vector<16x16x1xf32>
    %c3 = arith.constant 3 : index
    %c0_31 = arith.constant 0 : index
    %c0_32 = arith.constant 0 : index
    %c0_33 = arith.constant 0 : index
    %43 = vector.load %arg4[%c3, %c0_31, %c0_32, %c0_33] : memref<6x16x16x1xf32, #tpu.memory_space<vmem>>, vector<1x16x16x1xf32>
    %44 = vector.shape_cast %43 : vector<1x16x16x1xf32> to vector<16x16x1xf32>
    %c1_34 = arith.constant 1 : index
    %c0_35 = arith.constant 0 : index
    %c0_36 = arith.constant 0 : index
    %45 = vector.load %arg5[%c1_34, %c0_35, %c0_36] : memref<3x16x16xf32, #tpu.memory_space<vmem>>, vector<1x16x16xf32>
    %46 = vector.shape_cast %45 : vector<1x16x16xf32> to vector<16x16xf32>
    %c2_37 = arith.constant 2 : index
    %c0_38 = arith.constant 0 : index
    %c0_39 = arith.constant 0 : index
    %47 = vector.load %arg6[%c2_37, %c0_38, %c0_39] : memref<6x16x1xf32, #tpu.memory_space<vmem>>, vector<1x16x1xf32>
    %48 = vector.shape_cast %47 : vector<1x16x1xf32> to vector<16x1xf32>
    %c3_40 = arith.constant 3 : index
    %c0_41 = arith.constant 0 : index
    %c0_42 = arith.constant 0 : index
    %49 = vector.load %arg6[%c3_40, %c0_41, %c0_42] : memref<6x16x1xf32, #tpu.memory_space<vmem>>, vector<1x16x1xf32>
    %50 = vector.shape_cast %49 : vector<1x16x1xf32> to vector<16x1xf32>
    %51 = vector.broadcast %2 : vector<1x1x256xf32> to vector<16x16x256xf32>
    %52 = vector.broadcast %42 : vector<16x16x1xf32> to vector<16x16x256xf32>
    %53 = arith.mulf %51, %52 : vector<16x16x256xf32>
    %54 = vector.broadcast %44 : vector<16x16x1xf32> to vector<16x16x256xf32>
    %55 = arith.addf %53, %54 : vector<16x16x256xf32>
    %cst_43 = arith.constant 0.000000e+00 : f32
    %56 = vector.broadcast %cst_43 : f32 to vector<16x16x256xf32>
    %57 = arith.maximumf %55, %56 : vector<16x16x256xf32>
    %58 = tpu.concatenate %40, %40, %40, %40, %40, %40, %40, %40, %40, %40, %40, %40, %40, %40, %40, %40 in 1 : vector<16x16xf32>, vector<16x16xf32>, vector<16x16xf32>, vector<16x16xf32>, vector<16x16xf32>, vector<16x16xf32>, vector<16x16xf32>, vector<16x16xf32>, vector<16x16xf32>, vector<16x16xf32>, vector<16x16xf32>, vector<16x16xf32>, vector<16x16xf32>, vector<16x16xf32>, vector<16x16xf32>, vector<16x16xf32> -> vector<16x256xf32>
    %59 = vector.shape_cast %58 : vector<16x256xf32> to vector<16x1x256xf32>
    %60 = vector.broadcast %59 : vector<16x1x256xf32> to vector<16x16x256xf32>
    %61 = arith.mulf %57, %60 : vector<16x16x256xf32>
    %cst_44 = arith.constant dense<0.000000e+00> : vector<16x256xf32>
    %62 = vector.multi_reduction <add>, %61, %cst_44 [0] : vector<16x16x256xf32> to vector<16x256xf32>
    %cst_45 = arith.constant dense<0.000000e+00> : vector<16x16xf32>
    %63 = tpu.matmul %62, %4, %cst_45 {dimension_numbers = #tpu.dot_dimension_numbers<[1], [0], [0], [1], [0, 0, 1, 1], [], []>} : vector<16x256xf32>, vector<256x16xf32>, vector<16x16xf32> -> vector<16x16xf32>
    %cst_46 = arith.constant dense<0.000000e+00> : vector<16x16xf32>
    %64 = tpu.matmul %46, %40, %cst_46 {dimension_numbers = #tpu.dot_dimension_numbers<[1], [0], [0], [1], [0, 0, 1, 1], [], []>} : vector<16x16xf32>, vector<16x16xf32>, vector<16x16xf32> -> vector<16x16xf32>
    %65 = vector.broadcast %48 : vector<16x1xf32> to vector<16x16xf32>
    %66 = arith.mulf %63, %65 : vector<16x16xf32>
    %67 = arith.addf %66, %64 : vector<16x16xf32>
    %68 = vector.broadcast %50 : vector<16x1xf32> to vector<16x16xf32>
    %69 = arith.addf %67, %68 : vector<16x16xf32>
    %70 = arith.negf %69 : vector<16x16xf32>
    %71 = math.exp %70 : vector<16x16xf32>
    %cst_47 = arith.constant 1.000000e+00 : f32
    %72 = vector.broadcast %cst_47 : f32 to vector<16x16xf32>
    %73 = arith.addf %72, %71 : vector<16x16xf32>
    %74 = arith.divf %72, %73 : vector<16x16xf32>
    %c4 = arith.constant 4 : index
    %c0_48 = arith.constant 0 : index
    %c0_49 = arith.constant 0 : index
    %c0_50 = arith.constant 0 : index
    %75 = vector.load %arg4[%c4, %c0_48, %c0_49, %c0_50] : memref<6x16x16x1xf32, #tpu.memory_space<vmem>>, vector<1x16x16x1xf32>
    %76 = vector.shape_cast %75 : vector<1x16x16x1xf32> to vector<16x16x1xf32>
    %c5 = arith.constant 5 : index
    %c0_51 = arith.constant 0 : index
    %c0_52 = arith.constant 0 : index
    %c0_53 = arith.constant 0 : index
    %77 = vector.load %arg4[%c5, %c0_51, %c0_52, %c0_53] : memref<6x16x16x1xf32, #tpu.memory_space<vmem>>, vector<1x16x16x1xf32>
    %78 = vector.shape_cast %77 : vector<1x16x16x1xf32> to vector<16x16x1xf32>
    %c2_54 = arith.constant 2 : index
    %c0_55 = arith.constant 0 : index
    %c0_56 = arith.constant 0 : index
    %79 = vector.load %arg5[%c2_54, %c0_55, %c0_56] : memref<3x16x16xf32, #tpu.memory_space<vmem>>, vector<1x16x16xf32>
    %80 = vector.shape_cast %79 : vector<1x16x16xf32> to vector<16x16xf32>
    %c4_57 = arith.constant 4 : index
    %c0_58 = arith.constant 0 : index
    %c0_59 = arith.constant 0 : index
    %81 = vector.load %arg6[%c4_57, %c0_58, %c0_59] : memref<6x16x1xf32, #tpu.memory_space<vmem>>, vector<1x16x1xf32>
    %82 = vector.shape_cast %81 : vector<1x16x1xf32> to vector<16x1xf32>
    %c5_60 = arith.constant 5 : index
    %c0_61 = arith.constant 0 : index
    %c0_62 = arith.constant 0 : index
    %83 = vector.load %arg6[%c5_60, %c0_61, %c0_62] : memref<6x16x1xf32, #tpu.memory_space<vmem>>, vector<1x16x1xf32>
    %84 = vector.shape_cast %83 : vector<1x16x1xf32> to vector<16x1xf32>
    %85 = vector.broadcast %2 : vector<1x1x256xf32> to vector<16x16x256xf32>
    %86 = vector.broadcast %76 : vector<16x16x1xf32> to vector<16x16x256xf32>
    %87 = arith.mulf %85, %86 : vector<16x16x256xf32>
    %88 = vector.broadcast %78 : vector<16x16x1xf32> to vector<16x16x256xf32>
    %89 = arith.addf %87, %88 : vector<16x16x256xf32>
    %cst_63 = arith.constant 0.000000e+00 : f32
    %90 = vector.broadcast %cst_63 : f32 to vector<16x16x256xf32>
    %91 = arith.maximumf %89, %90 : vector<16x16x256xf32>
    %92 = tpu.concatenate %74, %74, %74, %74, %74, %74, %74, %74, %74, %74, %74, %74, %74, %74, %74, %74 in 1 : vector<16x16xf32>, vector<16x16xf32>, vector<16x16xf32>, vector<16x16xf32>, vector<16x16xf32>, vector<16x16xf32>, vector<16x16xf32>, vector<16x16xf32>, vector<16x16xf32>, vector<16x16xf32>, vector<16x16xf32>, vector<16x16xf32>, vector<16x16xf32>, vector<16x16xf32>, vector<16x16xf32>, vector<16x16xf32> -> vector<16x256xf32>
    %93 = vector.shape_cast %92 : vector<16x256xf32> to vector<16x1x256xf32>
    %94 = vector.broadcast %93 : vector<16x1x256xf32> to vector<16x16x256xf32>
    %95 = arith.mulf %91, %94 : vector<16x16x256xf32>
    %cst_64 = arith.constant dense<0.000000e+00> : vector<16x256xf32>
    %96 = vector.multi_reduction <add>, %95, %cst_64 [0] : vector<16x16x256xf32> to vector<16x256xf32>
    %cst_65 = arith.constant dense<0.000000e+00> : vector<16x16xf32>
    %97 = tpu.matmul %96, %4, %cst_65 {dimension_numbers = #tpu.dot_dimension_numbers<[1], [0], [0], [1], [0, 0, 1, 1], [], []>} : vector<16x256xf32>, vector<256x16xf32>, vector<16x16xf32> -> vector<16x16xf32>
    %cst_66 = arith.constant dense<0.000000e+00> : vector<16x16xf32>
    %98 = tpu.matmul %80, %74, %cst_66 {dimension_numbers = #tpu.dot_dimension_numbers<[1], [0], [0], [1], [0, 0, 1, 1], [], []>} : vector<16x16xf32>, vector<16x16xf32>, vector<16x16xf32> -> vector<16x16xf32>
    %99 = vector.broadcast %82 : vector<16x1xf32> to vector<16x16xf32>
    %100 = arith.mulf %97, %99 : vector<16x16xf32>
    %101 = arith.addf %100, %98 : vector<16x16xf32>
    %102 = vector.broadcast %84 : vector<16x1xf32> to vector<16x16xf32>
    %103 = arith.addf %101, %102 : vector<16x16xf32>
    %104 = arith.negf %103 : vector<16x16xf32>
    %105 = math.exp %104 : vector<16x16xf32>
    %cst_67 = arith.constant 1.000000e+00 : f32
    %106 = vector.broadcast %cst_67 : f32 to vector<16x16xf32>
    %107 = arith.addf %106, %105 : vector<16x16xf32>
    %108 = arith.divf %106, %107 : vector<16x16xf32>
    %109 = arith.addf %108, %40 : vector<16x16xf32>
    %cst_68 = arith.constant 5.000000e-01 : f32
    %110 = vector.broadcast %cst_68 : f32 to vector<16x16xf32>
    %111 = arith.mulf %109, %110 : vector<16x16xf32>
    %c0_69 = arith.constant 0 : index
    %c0_70 = arith.constant 0 : index
    %c0_71 = arith.constant 0 : index
    %112 = vector.load %arg7[%c0_69, %c0_70, %c0_71] : memref<1x16x16xf32, #tpu.memory_space<vmem>>, vector<1x16x16xf32>
    %113 = vector.shape_cast %112 : vector<1x16x16xf32> to vector<16x16xf32>
    %114 = vector.shape_cast %111 : vector<16x16xf32> to vector<1x16x16xf32>
    tpu.vector_store %arg7[%c0_69, %c0_70, %c0_71], %114 {strides = array<i32>} : memref<1x16x16xf32, #tpu.memory_space<vmem>>, vector<1x16x16xf32>,
    return
  }
  func.func @transform_0(%arg0: i32) -> (i32, i32, i32) {
    %c0_i32 = arith.constant 0 : i32
    %c0_i32_0 = arith.constant 0 : i32
    %c0_i32_1 = arith.constant 0 : i32
    return %arg0, %c0_i32, %c0_i32_0 : i32, i32, i32
  }
  func.func @transform_1(%arg0: i32) -> (i32, i32, i32) {
    %c0_i32 = arith.constant 0 : i32
    %c0_i32_0 = arith.constant 0 : i32
    %c0_i32_1 = arith.constant 0 : i32
    return %arg0, %c0_i32, %c0_i32_0 : i32, i32, i32
  }
  func.func @transform_2(%arg0: i32) -> (i32, i32, i32) {
    %c0_i32 = arith.constant 0 : i32
    %c0_i32_0 = arith.constant 0 : i32
    %c0_i32_1 = arith.constant 0 : i32
    return %arg0, %c0_i32, %c0_i32_0 : i32, i32, i32
  }
  func.func @transform_3(%arg0: i32) -> (i32, i32, i32, i32) {
    %c0_i32 = arith.constant 0 : i32
    %c0_i32_0 = arith.constant 0 : i32
    %c0_i32_1 = arith.constant 0 : i32
    %c0_i32_2 = arith.constant 0 : i32
    %c0_i32_3 = arith.constant 0 : i32
    return %c0_i32, %c0_i32_0, %c0_i32_1, %c0_i32_2 : i32, i32, i32, i32
  }
  func.func @transform_4(%arg0: i32) -> (i32, i32, i32) {
    %c0_i32 = arith.constant 0 : i32
    %c0_i32_0 = arith.constant 0 : i32
    %c0_i32_1 = arith.constant 0 : i32
    %c0_i32_2 = arith.constant 0 : i32
    return %c0_i32, %c0_i32_0, %c0_i32_1 : i32, i32, i32
  }
  func.func @transform_5(%arg0: i32) -> (i32, i32, i32) {
    %c0_i32 = arith.constant 0 : i32
    %c0_i32_0 = arith.constant 0 : i32
    %c0_i32_1 = arith.constant 0 : i32
    %c0_i32_2 = arith.constant 0 : i32
    return %c0_i32, %c0_i32_0, %c0_i32_1 : i32, i32, i32
  }
  func.func @transform_6(%arg0: i32) -> (i32, i32, i32) {
    %c0_i32 = arith.constant 0 : i32
    %c0_i32_0 = arith.constant 0 : i32
    %c0_i32_1 = arith.constant 0 : i32
    return %arg0, %c0_i32, %c0_i32_0 : i32, i32, i32
  }
}

</mosaic_0001>

<llo_original>
// kernel: aligner_forward.1
$region0: #{aligner_forward.1}
  #allocation0 [shape = 'u32[]', space=smem, size = 0x4, offset = 0x4, fixed_abs, tag = 'smem constant byte address 0x4 - core index']
  #allocation1 [shape = 'u32[72,128]{1,0:T(1,128)}', space=vmem, size = 0x9000, scoped, tag = 'internal scratch']
  %s0 = inlined_call_operand.vmem [shape: f32[4,16,16], index: 0, kind: input, shape index: {}]
  %s1 = inlined_call_operand.vmem [shape: f32[4,1,256], index: 1, kind: input, shape index: {}]
  %s2 = inlined_call_operand.vmem [shape: f32[4,256,16], index: 2, kind: input, shape index: {}]
  %s3 = inlined_call_operand.vmem [shape: f32[6,16,16,1], index: 3, kind: input, shape index: {}]
  %s4 = inlined_call_operand.vmem [shape: f32[3,16,16], index: 4, kind: input, shape index: {}]
  %s5 = inlined_call_operand.vmem [shape: f32[6,16,1], index: 5, kind: input, shape index: {}]
  %s6 = inlined_call_operand.vmem [shape: f32[4,16,16], index: 6, kind: output, shape index: {}]
  %s7 = sld [smem:[#allocation0]]
  $region57: #{aligner_forward.1} parent=0
    _
  %s9 = ssub.s32 1, %s7
  %s10 = scalar_select 0, %s9, %s7
  loop: start=0, step=1, limit=6
  $region2: #{aligner_forward.1} parent=0 // loop_pre_header
    _
  $region3: #{aligner_forward.1} parent=0 // loop_header
    %s12 = sphi 0, %s16
    %p13 = scmp.ge.s32.totalorder %s12, 6
    %s22 = sphi 0, %s24
    %s25 = sphi 0, %s22
    %s26 = sphi 0, %s25
    %s42 = sphi 0, %s26
    %s48 = sphi 0, %s50
    %s51 = sphi 0, %s48
    %s52 = sphi 0, %s51
    %s68 = sphi 0, %s52
    %s74 = sphi 0, %s76
    %s77 = sphi 0, %s74
    %s78 = sphi 0, %s77
    %s94 = sphi 0, %s78
    %s98 = sphi 0, %s98
    %s100 = sphi 0, %s98
    %s101 = sphi 0, %s100
    %s115 = sphi 0, %s101
    %s119 = sphi 0, %s119
    %s121 = sphi 0, %s119
    %s122 = sphi 0, %s121
    %s136 = sphi 0, %s122
    %s140 = sphi 0, %s140
    %s142 = sphi 0, %s140
    %s143 = sphi 0, %s142
    %s157 = sphi 0, %s143
    %s163 = sphi 0, %s165
    %s166 = sphi 0, %s163
    %s167 = sphi 0, %s166
    %s183 = sphi 0, %s167
  $region4: #{aligner_forward.1} parent=0 // loop_header_branch
    %15 = sbr.rel (%p13) target = $region8
  $region5: #{aligner_forward.1} parent=0 // loop_body
    %s17 = ssub.s32 %s12, 1
    %s18 = ssub.s32 %s12, 2
    %s19 = sadd.s32 %s12, 1
    %s20 = ssub.s32 %s12, %s19
    %p21 = scmp.eq.s32.totalorder %s20, 0
    %s23 = sadd.s32 %s22, 1
    %s24 = scalar_select %p21, %s22, %s23
    %p27 = pneg %p21
    %p28 = scmp.eq.s32.totalorder %s12, 3
    %p29 = por %p27, %p28
    %p30 = scmp.ne.s32.totalorder %s22, %s25
    %p31 = scmp.eq.s32.totalorder %s12, 0
    %p32 = por %p30, %p31
    %p33 = scmp.ne.s32.totalorder %s22, %s25
    %p34 = scmp.eq.s32.totalorder %s17, 3
    %p35 = por %p33, %p34
    %p36 = scmp.ne.s32.totalorder %s25, %s26
    %p37 = scmp.eq.s32.totalorder %s17, 0
    %p38 = por %p36, %p37
    %p39 = scmp.ne.s32.totalorder %s25, %s26
    %p40 = scmp.eq.s32.totalorder %s18, 3
    %p41 = por %p39, %p40
    %p43 = scmp.ne.s32.totalorder %s26, %s42
    %p44 = scmp.eq.s32.totalorder %s18, 0
    %p45 = por %p43, %p44
    %s46 = ssub.s32 %s12, %s19
    %p47 = scmp.eq.s32.totalorder %s46, 0
    %s49 = sadd.s32 %s48, 1
    %s50 = scalar_select %p47, %s48, %s49
    %p53 = pneg %p47
    %p54 = scmp.eq.s32.totalorder %s12, 3
    %p55 = por %p53, %p54
    %p56 = scmp.ne.s32.totalorder %s48, %s51
    %p57 = scmp.eq.s32.totalorder %s12, 0
    %p58 = por %p56, %p57
    %p59 = scmp.ne.s32.totalorder %s48, %s51
    %p60 = scmp.eq.s32.totalorder %s17, 3
    %p61 = por %p59, %p60
    %p62 = scmp.ne.s32.totalorder %s51, %s52
    %p63 = scmp.eq.s32.totalorder %s17, 0
    %p64 = por %p62, %p63
    %p65 = scmp.ne.s32.totalorder %s51, %s52
    %p66 = scmp.eq.s32.totalorder %s18, 3
    %p67 = por %p65, %p66
    %p69 = scmp.ne.s32.totalorder %s52, %s68
    %p70 = scmp.eq.s32.totalorder %s18, 0
    %p71 = por %p69, %p70
    %s72 = ssub.s32 %s12, %s19
    %p73 = scmp.eq.s32.totalorder %s72, 0
    %s75 = sadd.s32 %s74, 1
    %s76 = scalar_select %p73, %s74, %s75
    %p79 = pneg %p73
    %p80 = scmp.eq.s32.totalorder %s12, 3
    %p81 = por %p79, %p80
    %p82 = scmp.ne.s32.totalorder %s74, %s77
    %p83 = scmp.eq.s32.totalorder %s12, 0
    %p84 = por %p82, %p83
    %p85 = scmp.ne.s32.totalorder %s74, %s77
    %p86 = scmp.eq.s32.totalorder %s17, 3
    %p87 = por %p85, %p86
    %p88 = scmp.ne.s32.totalorder %s77, %s78
    %p89 = scmp.eq.s32.totalorder %s17, 0
    %p90 = por %p88, %p89
    %p91 = scmp.ne.s32.totalorder %s77, %s78
    %p92 = scmp.eq.s32.totalorder %s18, 3
    %p93 = por %p91, %p92
    %p95 = scmp.ne.s32.totalorder %s78, %s94
    %p96 = scmp.eq.s32.totalorder %s18, 0
    %p97 = por %p95, %p96
    %s99 = sadd.s32 %s98, 1
    %p102 = scmp.eq.s32.totalorder %s12, 3
    %p103 = scmp.ne.s32.totalorder %s98, %s100
    %p104 = scmp.eq.s32.totalorder %s12, 0
    %p105 = por %p103, %p104
    %p106 = scmp.ne.s32.totalorder %s98, %s100
    %p107 = scmp.eq.s32.totalorder %s17, 3
    %p108 = por %p106, %p107
    %p109 = scmp.ne.s32.totalorder %s100, %s101
    %p110 = scmp.eq.s32.totalorder %s17, 0
    %p111 = por %p109, %p110
    %p112 = scmp.ne.s32.totalorder %s100, %s101
    %p113 = scmp.eq.s32.totalorder %s18, 3
    %p114 = por %p112, %p113
    %p116 = scmp.ne.s32.totalorder %s101, %s115
    %p117 = scmp.eq.s32.totalorder %s18, 0
    %p118 = por %p116, %p117
    %s120 = sadd.s32 %s119, 1
    %p123 = scmp.eq.s32.totalorder %s12, 3
    %p124 = scmp.ne.s32.totalorder %s119, %s121
    %p125 = scmp.eq.s32.totalorder %s12, 0
    %p126 = por %p124, %p125
    %p127 = scmp.ne.s32.totalorder %s119, %s121
    %p128 = scmp.eq.s32.totalorder %s17, 3
    %p129 = por %p127, %p128
    %p130 = scmp.ne.s32.totalorder %s121, %s122
    %p131 = scmp.eq.s32.totalorder %s17, 0
    %p132 = por %p130, %p131
    %p133 = scmp.ne.s32.totalorder %s121, %s122
    %p134 = scmp.eq.s32.totalorder %s18, 3
    %p135 = por %p133, %p134
    %p137 = scmp.ne.s32.totalorder %s122, %s136
    %p138 = scmp.eq.s32.totalorder %s18, 0
    %p139 = por %p137, %p138
    %s141 = sadd.s32 %s140, 1
    %p144 = scmp.eq.s32.totalorder %s12, 3
    %p145 = scmp.ne.s32.totalorder %s140, %s142
    %p146 = scmp.eq.s32.totalorder %s12, 0
    %p147 = por %p145, %p146
    %p148 = scmp.ne.s32.totalorder %s140, %s142
    %p149 = scmp.eq.s32.totalorder %s17, 3
    %p150 = por %p148, %p149
    %p151 = scmp.ne.s32.totalorder %s142, %s143
    %p152 = scmp.eq.s32.totalorder %s17, 0
    %p153 = por %p151, %p152
    %p154 = scmp.ne.s32.totalorder %s142, %s143
    %p155 = scmp.eq.s32.totalorder %s18, 3
    %p156 = por %p154, %p155
    %p158 = scmp.ne.s32.totalorder %s143, %s157
    %p159 = scmp.eq.s32.totalorder %s18, 0
    %p160 = por %p158, %p159
    %s161 = ssub.s32 %s12, %s19
    %p162 = scmp.eq.s32.totalorder %s161, 0
    %s164 = sadd.s32 %s163, 1
    %s165 = scalar_select %p162, %s163, %s164
    %p168 = pneg %p162
    %p169 = scmp.eq.s32.totalorder %s12, 3
    %p170 = por %p168, %p169
    %p171 = scmp.ne.s32.totalorder %s163, %s166
    %p172 = scmp.eq.s32.totalorder %s12, 0
    %p173 = por %p171, %p172
    %p174 = scmp.ne.s32.totalorder %s163, %s166
    %p175 = scmp.eq.s32.totalorder %s17, 3
    %p176 = por %p174, %p175
    %p177 = scmp.ne.s32.totalorder %s166, %s167
    %p178 = scmp.eq.s32.totalorder %s17, 0
    %p179 = por %p177, %p178
    %p180 = scmp.ne.s32.totalorder %s166, %s167
    %p181 = scmp.eq.s32.totalorder %s18, 3
    %p182 = por %p180, %p181
    %p184 = scmp.ne.s32.totalorder %s167, %s183
    %p185 = scmp.eq.s32.totalorder %s18, 0
    %p186 = por %p184, %p185
    %p187 = scmp.le.s32.totalorder 1, %s12
    %p188 = scmp.lt.s32.totalorder %s12, 5
    %p189 = pnand %p187, %p188
    %p190 = pneg %p189
    // Predicated region
    $region9: #{aligner_forward.1} parent=5 // pred_check
      _
    $region10: #{aligner_forward.1} parent=5 // pred_check_branch
      %192 = sbr.rel (%p189) target = $region12
    $region11: #{aligner_forward.1} parent=5 // pred_region
      %s193 = ssub.s32 %s12, 1
      // Predicated region
      $region13: #{aligner_forward.1} parent=11 // pred_check
        %p194 = pneg %p111
      $region14: #{aligner_forward.1} parent=11 // pred_check_branch
        %196 = sbr.rel (%p194) target = $region16
      $region15: #{aligner_forward.1} parent=11 // pred_region
        _
      $region16: #{aligner_forward.1} parent=11 // pred_fallthru
        _
      // Predicated region
      $region17: #{aligner_forward.1} parent=11 // pred_check
        %p197 = pneg %p132
      $region18: #{aligner_forward.1} parent=11 // pred_check_branch
        %199 = sbr.rel (%p197) target = $region20
      $region19: #{aligner_forward.1} parent=11 // pred_region
        _
      $region20: #{aligner_forward.1} parent=11 // pred_fallthru
        _
      // Predicated region
      $region21: #{aligner_forward.1} parent=11 // pred_check
        %p200 = pneg %p153
      $region22: #{aligner_forward.1} parent=11 // pred_check_branch
        %202 = sbr.rel (%p200) target = $region24
      $region23: #{aligner_forward.1} parent=11 // pred_region
        _
      $region24: #{aligner_forward.1} parent=11 // pred_fallthru
        _
    $region12: #{aligner_forward.1} parent=5 // pred_fallthru
      _
    %p203 = scmp.lt.s32.totalorder %s12, 4
    // Predicated region
    $region25: #{aligner_forward.1} parent=5 // pred_check
      %p204 = pneg %p203
    $region26: #{aligner_forward.1} parent=5 // pred_check_branch
      %206 = sbr.rel (%p204) target = $region28
    $region27: #{aligner_forward.1} parent=5 // pred_region
      // Predicated region
      $region29: #{aligner_forward.1} parent=27 // pred_check
        %p207 = pneg %p32
      $region30: #{aligner_forward.1} parent=27 // pred_check_branch
        %209 = sbr.rel (%p207) target = $region32
      $region31: #{aligner_forward.1} parent=27 // pred_region
        %p210 = scmp.lt.s32.totalorder %s12, 3
        %s211 = scalar_select %p210, %s12, 3
        %s212 = smul.addr %s211, 2
        %s213 = smul.addr %s212, 8
        %s214 = scalar_lea.vmem %s0, %s213
      $region32: #{aligner_forward.1} parent=27 // pred_fallthru
        _
      // Predicated region
      $region33: #{aligner_forward.1} parent=27 // pred_check
        %p215 = pneg %p58
      $region34: #{aligner_forward.1} parent=27 // pred_check_branch
        %217 = sbr.rel (%p215) target = $region36
      $region35: #{aligner_forward.1} parent=27 // pred_region
        %p218 = scmp.lt.s32.totalorder %s12, 3
        %s219 = scalar_select %p218, %s12, 3
        %s220 = smul.addr %s219, 2
        %s221 = scalar_lea.vmem %s1, %s220
      $region36: #{aligner_forward.1} parent=27 // pred_fallthru
        _
      // Predicated region
      $region37: #{aligner_forward.1} parent=27 // pred_check
        %p222 = pneg %p84
      $region38: #{aligner_forward.1} parent=27 // pred_check_branch
        %224 = sbr.rel (%p222) target = $region40
      $region39: #{aligner_forward.1} parent=27 // pred_region
        %p225 = scmp.lt.s32.totalorder %s12, 3
        %s226 = scalar_select %p225, %s12, 3
        %s227 = smul.addr %s226, 32
        %s228 = smul.addr %s227, 8
        %s229 = scalar_lea.vmem %s2, %s228
      $region40: #{aligner_forward.1} parent=27 // pred_fallthru
        _
    $region28: #{aligner_forward.1} parent=5 // pred_fallthru
      _
    %p230 = scmp.le.s32.totalorder 1, %s12
    %p231 = scmp.lt.s32.totalorder %s12, 5
    %p232 = pnand %p230, %p231
    %p233 = pneg %p232
    // Predicated region
    $region41: #{aligner_forward.1} parent=5 // pred_check
      _
    $region42: #{aligner_forward.1} parent=5 // pred_check_branch
      %235 = sbr.rel (%p232) target = $region44
    $region43: #{aligner_forward.1} parent=5 // pred_region
      %s236 = ssub.s32 %s12, 1
      %p237 = scmp.lt.s32.totalorder %s17, 3
      %s238 = scalar_select %p237, %s17, 3
      %s239 = smul.addr %s238, 2
      %s240 = smul.addr %s239, 8
      %s241 = scalar_lea.vmem %s0, %s240
      %p242 = pneg %p38
      %p243 = pneg %p35
      %p244 = scmp.lt.s32.totalorder %s17, 3
      %s245 = scalar_select %p244, %s17, 3
      %s246 = smul.addr %s245, 2
      %s247 = scalar_lea.vmem %s1, %s246
      %p248 = pneg %p64
      %p249 = pneg %p61
      %p250 = scmp.lt.s32.totalorder %s17, 3
      %s251 = scalar_select %p250, %s17, 3
      %s252 = smul.addr %s251, 32
      %s253 = smul.addr %s252, 8
      %s254 = scalar_lea.vmem %s2, %s253
      %p255 = pneg %p90
      %p256 = pneg %p87
      %p257 = pneg %p111
      %p258 = pneg %p108
      %p259 = pneg %p132
      %p260 = pneg %p129
      %p261 = pneg %p153
      %p262 = pneg %p150
      %p263 = pneg %p179
      %p264 = pneg %p176
      %p265 = scmp.lt.s32.totalorder %s17, 3
      %s266 = scalar_select %p265, %s17, 3
      %s267 = smul.addr %s266, 2
      %s268 = smul.addr %s267, 8
      %s269 = scalar_lea.vmem %s6, %s268
      %p270 = scmp.lt.s32.totalorder %s17, 3
      %s271 = scalar_select %p270, %s17, 3
      %s272 = smul.addr %s271, 2
      %s273 = smul.addr %s272, 8
      %s274 = scalar_lea.vmem %s0, %s273
      %p275 = scmp.lt.s32.totalorder %s17, 3
      %s276 = scalar_select %p275, %s17, 3
      %s277 = smul.addr %s276, 2
      %s278 = scalar_lea.vmem %s1, %s277
      %p279 = scmp.lt.s32.totalorder %s17, 3
      %s280 = scalar_select %p279, %s17, 3
      %s281 = smul.addr %s280, 32
      %s282 = smul.addr %s281, 8
      %s283 = scalar_lea.vmem %s2, %s282
      %p284 = scmp.lt.s32.totalorder %s17, 3
      %s285 = scalar_select %p284, %s17, 3
      %s286 = smul.addr %s285, 2
      %s287 = smul.addr %s286, 8
      %s288 = scalar_lea.vmem %s6, %s287
      %v289 = vld [vmem:[%s278] sm:$0x3]
      %v290 = vld [vmem:[%s283] sm:$0xff]
      %v291 = vld [vmem:[%s283 + $0x8] sm:$0xff]
      %v292 = vld [vmem:[%s283 + $0x10] sm:$0xff]
      %v293 = vld [vmem:[%s283 + $0x18] sm:$0xff]
      %v294 = vld [vmem:[%s283 + $0x20] sm:$0xff]
      %v295 = vld [vmem:[%s283 + $0x28] sm:$0xff]
      %v296 = vld [vmem:[%s283 + $0x30] sm:$0xff]
      %v297 = vld [vmem:[%s283 + $0x38] sm:$0xff]
      %v298 = vld [vmem:[%s283 + $0x40] sm:$0xff]
      %v299 = vld [vmem:[%s283 + $0x48] sm:$0xff]
      %v300 = vld [vmem:[%s283 + $0x50] sm:$0xff]
      %v301 = vld [vmem:[%s283 + $0x58] sm:$0xff]
      %v302 = vld [vmem:[%s283 + $0x60] sm:$0xff]
      %v303 = vld [vmem:[%s283 + $0x68] sm:$0xff]
      %v304 = vld [vmem:[%s283 + $0x70] sm:$0xff]
      %v305 = vld [vmem:[%s283 + $0x78] sm:$0xff]
      %v306 = vld [vmem:[%s283 + $0x80] sm:$0xff]
      %v307 = vld [vmem:[%s283 + $0x88] sm:$0xff]
      %v308 = vld [vmem:[%s283 + $0x90] sm:$0xff]
      %v309 = vld [vmem:[%s283 + $0x98] sm:$0xff]
      %v310 = vld [vmem:[%s283 + $0xa0] sm:$0xff]
      %v311 = vld [vmem:[%s283 + $0xa8] sm:$0xff]
      %v312 = vld [vmem:[%s283 + $0xb0] sm:$0xff]
      %v313 = vld [vmem:[%s283 + $0xb8] sm:$0xff]
      %v314 = vld [vmem:[%s283 + $0xc0] sm:$0xff]
      %v315 = vld [vmem:[%s283 + $0xc8] sm:$0xff]
      %v316 = vld [vmem:[%s283 + $0xd0] sm:$0xff]
      %v317 = vld [vmem:[%s283 + $0xd8] sm:$0xff]
      %v318 = vld [vmem:[%s283 + $0xe0] sm:$0xff]
      %v319 = vld [vmem:[%s283 + $0xe8] sm:$0xff]
      %v320 = vld [vmem:[%s283 + $0xf0] sm:$0xff]
      %v321 = vld [vmem:[%s283 + $0xf8] sm:$0xff]
      %v322 = vld [vmem:[%s274] sm:$0xff]
      %v323 = vld [vmem:[%s274 + $0x8] sm:$0xff]
      %v324 = vld [vmem:[%s3] sm:$0xff]
      %v325 = vld [vmem:[%s3 + $0x8] sm:$0xff]
      %v326 = vld [vmem:[%s3 + $0x10] sm:$0xff]
      %v327 = vld [vmem:[%s3 + $0x18] sm:$0xff]
      %v328 = vld [vmem:[%s3 + $0x20] sm:$0xff]
      %v329 = vld [vmem:[%s3 + $0x28] sm:$0xff]
      %v330 = vld [vmem:[%s3 + $0x30] sm:$0xff]
      %v331 = vld [vmem:[%s3 + $0x38] sm:$0xff]
      %v332 = vld [vmem:[%s3 + $0x40] sm:$0xff]
      %v333 = vld [vmem:[%s3 + $0x48] sm:$0xff]
      %v334 = vld [vmem:[%s3 + $0x50] sm:$0xff]
      %v335 = vld [vmem:[%s3 + $0x58] sm:$0xff]
      %v336 = vld [vmem:[%s3 + $0x60] sm:$0xff]
      %v337 = vld [vmem:[%s3 + $0x68] sm:$0xff]
      %v338 = vld [vmem:[%s3 + $0x70] sm:$0xff]
      %v339 = vld [vmem:[%s3 + $0x78] sm:$0xff]
      %v340 = vld [vmem:[%s3 + $0x80] sm:$0xff]
      %v341 = vld [vmem:[%s3 + $0x88] sm:$0xff]
      %v342 = vld [vmem:[%s3 + $0x90] sm:$0xff]
      %v343 = vld [vmem:[%s3 + $0x98] sm:$0xff]
      %v344 = vld [vmem:[%s3 + $0xa0] sm:$0xff]
      %v345 = vld [vmem:[%s3 + $0xa8] sm:$0xff]
      %v346 = vld [vmem:[%s3 + $0xb0] sm:$0xff]
      %v347 = vld [vmem:[%s3 + $0xb8] sm:$0xff]
      %v348 = vld [vmem:[%s3 + $0xc0] sm:$0xff]
      %v349 = vld [vmem:[%s3 + $0xc8] sm:$0xff]
      %v350 = vld [vmem:[%s3 + $0xd0] sm:$0xff]
      %v351 = vld [vmem:[%s3 + $0xd8] sm:$0xff]
      %v352 = vld [vmem:[%s3 + $0xe0] sm:$0xff]
      %v353 = vld [vmem:[%s3 + $0xe8] sm:$0xff]
      %v354 = vld [vmem:[%s3 + $0xf0] sm:$0xff]
      %v355 = vld [vmem:[%s3 + $0xf8] sm:$0xff]
      %s356 = scalar_lea.vmem %s3, 256
      %v357 = vld [vmem:[%s356] sm:$0xff]
      %v358 = vld [vmem:[%s356 + $0x8] sm:$0xff]
      %v359 = vld [vmem:[%s356 + $0x10] sm:$0xff]
      %v360 = vld [vmem:[%s356 + $0x18] sm:$0xff]
      %v361 = vld [vmem:[%s356 + $0x20] sm:$0xff]
      %v362 = vld [vmem:[%s356 + $0x28] sm:$0xff]
      %v363 = vld [vmem:[%s356 + $0x30] sm:$0xff]
      %v364 = vld [vmem:[%s356 + $0x38] sm:$0xff]
      %v365 = vld [vmem:[%s356 + $0x40] sm:$0xff]
      %v366 = vld [vmem:[%s356 + $0x48] sm:$0xff]
      %v367 = vld [vmem:[%s356 + $0x50] sm:$0xff]
      %v368 = vld [vmem:[%s356 + $0x58] sm:$0xff]
      %v369 = vld [vmem:[%s356 + $0x60] sm:$0xff]
      %v370 = vld [vmem:[%s356 + $0x68] sm:$0xff]
      %v371 = vld [vmem:[%s356 + $0x70] sm:$0xff]
      %v372 = vld [vmem:[%s356 + $0x78] sm:$0xff]
      %v373 = vld [vmem:[%s356 + $0x80] sm:$0xff]
      %v374 = vld [vmem:[%s356 + $0x88] sm:$0xff]
      %v375 = vld [vmem:[%s356 + $0x90] sm:$0xff]
      %v376 = vld [vmem:[%s356 + $0x98] sm:$0xff]
      %v377 = vld [vmem:[%s356 + $0xa0] sm:$0xff]
      %v378 = vld [vmem:[%s356 + $0xa8] sm:$0xff]
      %v379 = vld [vmem:[%s356 + $0xb0] sm:$0xff]
      %v380 = vld [vmem:[%s356 + $0xb8] sm:$0xff]
      %v381 = vld [vmem:[%s356 + $0xc0] sm:$0xff]
      %v382 = vld [vmem:[%s356 + $0xc8] sm:$0xff]
      %v383 = vld [vmem:[%s356 + $0xd0] sm:$0xff]
      %v384 = vld [vmem:[%s356 + $0xd8] sm:$0xff]
      %v385 = vld [vmem:[%s356 + $0xe0] sm:$0xff]
      %v386 = vld [vmem:[%s356 + $0xe8] sm:$0xff]
      %v387 = vld [vmem:[%s356 + $0xf0] sm:$0xff]
      %v388 = vld [vmem:[%s356 + $0xf8] sm:$0xff]
      %v389 = vld [vmem:[%s4] sm:$0xff]
      %v390 = vld [vmem:[%s4 + $0x8] sm:$0xff]
      %v391 = vld [vmem:[%s5] sm:$0xff]
      %v392 = vld [vmem:[%s5 + $0x8] sm:$0xff]
      %s393 = scalar_lea.vmem %s5, 16
      %v394 = vld [vmem:[%s393] sm:$0xff]
      %v395 = vld [vmem:[%s393 + $0x8] sm:$0xff]
      %v397 = vperm.slane %v289, 0
      %v398 = vperm.slane %v289, 1
      %402 = vset.pattern.permute.xlu0 0
      %403 = vperm.xlu0 %402, %v324
      %v404 = vpop.permute.xlu0 %403
      %407 = vset.pattern.permute.xlu0 0
      %408 = vperm.xlu0 %407, %v325
      %v409 = vpop.permute.xlu0 %408
      %412 = vset.pattern.permute.xlu0 0
      %413 = vperm.xlu0 %412, %v326
      %v414 = vpop.permute.xlu0 %413
      %417 = vset.pattern.permute.xlu0 0
      %418 = vperm.xlu0 %417, %v327
      %v419 = vpop.permute.xlu0 %418
      %422 = vset.pattern.permute.xlu0 0
      %423 = vperm.xlu0 %422, %v328
      %v424 = vpop.permute.xlu0 %423
      %427 = vset.pattern.permute.xlu0 0
      %428 = vperm.xlu0 %427, %v329
      %v429 = vpop.permute.xlu0 %428
      %432 = vset.pattern.permute.xlu0 0
      %433 = vperm.xlu0 %432, %v330
      %v434 = vpop.permute.xlu0 %433
      %437 = vset.pattern.permute.xlu0 0
      %438 = vperm.xlu0 %437, %v331
      %v439 = vpop.permute.xlu0 %438
      %442 = vset.pattern.permute.xlu0 0
      %443 = vperm.xlu0 %442, %v332
      %v444 = vpop.permute.xlu0 %443
      %447 = vset.pattern.permute.xlu0 0
      %448 = vperm.xlu0 %447, %v333
      %v449 = vpop.permute.xlu0 %448
      %452 = vset.pattern.permute.xlu0 0
      %453 = vperm.xlu0 %452, %v334
      %v454 = vpop.permute.xlu0 %453
      %457 = vset.pattern.permute.xlu0 0
      %458 = vperm.xlu0 %457, %v335
      %v459 = vpop.permute.xlu0 %458
      %462 = vset.pattern.permute.xlu0 0
      %463 = vperm.xlu0 %462, %v336
      %v464 = vpop.permute.xlu0 %463
      %467 = vset.pattern.permute.xlu0 0
      %468 = vperm.xlu0 %467, %v337
      %v469 = vpop.permute.xlu0 %468
      %472 = vset.pattern.permute.xlu0 0
      %473 = vperm.xlu0 %472, %v338
      %v474 = vpop.permute.xlu0 %473
      %477 = vset.pattern.permute.xlu0 0
      %478 = vperm.xlu0 %477, %v339
      %v479 = vpop.permute.xlu0 %478
      %482 = vset.pattern.permute.xlu0 0
      %483 = vperm.xlu0 %482, %v340
      %v484 = vpop.permute.xlu0 %483
      %487 = vset.pattern.permute.xlu0 0
      %488 = vperm.xlu0 %487, %v341
      %v489 = vpop.permute.xlu0 %488
      %492 = vset.pattern.permute.xlu0 0
      %493 = vperm.xlu0 %492, %v342
      %v494 = vpop.permute.xlu0 %493
      %497 = vset.pattern.permute.xlu0 0
      %498 = vperm.xlu0 %497, %v343
      %v499 = vpop.permute.xlu0 %498
      %502 = vset.pattern.permute.xlu0 0
      %503 = vperm.xlu0 %502, %v344
      %v504 = vpop.permute.xlu0 %503
      %507 = vset.pattern.permute.xlu0 0
      %508 = vperm.xlu0 %507, %v345
      %v509 = vpop.permute.xlu0 %508
      %512 = vset.pattern.permute.xlu0 0
      %513 = vperm.xlu0 %512, %v346
      %v514 = vpop.permute.xlu0 %513
      %517 = vset.pattern.permute.xlu0 0
      %518 = vperm.xlu0 %517, %v347
      %v519 = vpop.permute.xlu0 %518
      %522 = vset.pattern.permute.xlu0 0
      %523 = vperm.xlu0 %522, %v348
      %v524 = vpop.permute.xlu0 %523
      %527 = vset.pattern.permute.xlu0 0
      %528 = vperm.xlu0 %527, %v349
      %v529 = vpop.permute.xlu0 %528
      %532 = vset.pattern.permute.xlu0 0
      %533 = vperm.xlu0 %532, %v350
      %v534 = vpop.permute.xlu0 %533
      %537 = vset.pattern.permute.xlu0 0
      %538 = vperm.xlu0 %537, %v351
      %v539 = vpop.permute.xlu0 %538
      %542 = vset.pattern.permute.xlu0 0
      %543 = vperm.xlu0 %542, %v352
      %v544 = vpop.permute.xlu0 %543
      %547 = vset.pattern.permute.xlu0 0
      %548 = vperm.xlu0 %547, %v353
      %v549 = vpop.permute.xlu0 %548
      %552 = vset.pattern.permute.xlu0 0
      %553 = vperm.xlu0 %552, %v354
      %v554 = vpop.permute.xlu0 %553
      %557 = vset.pattern.permute.xlu0 0
      %558 = vperm.xlu0 %557, %v355
      %v559 = vpop.permute.xlu0 %558
      %v561 = vmul.f32 %v397, %v404
      %v562 = vmul.f32 %v398, %v404
      %v563 = vmul.f32 %v397, %v409
      %v564 = vmul.f32 %v398, %v409
      %v565 = vmul.f32 %v397, %v414
      %v566 = vmul.f32 %v398, %v414
      %v567 = vmul.f32 %v397, %v419
      %v568 = vmul.f32 %v398, %v419
      %v569 = vmul.f32 %v397, %v424
      %v570 = vmul.f32 %v398, %v424
      %v571 = vmul.f32 %v397, %v429
      %v572 = vmul.f32 %v398, %v429
      %v573 = vmul.f32 %v397, %v434
      %v574 = vmul.f32 %v398, %v434
      %v575 = vmul.f32 %v397, %v439
      %v576 = vmul.f32 %v398, %v439
      %v577 = vmul.f32 %v397, %v444
      %v578 = vmul.f32 %v398, %v444
      %v579 = vmul.f32 %v397, %v449
      %v580 = vmul.f32 %v398, %v449
      %v581 = vmul.f32 %v397, %v454
      %v582 = vmul.f32 %v398, %v454
      %v583 = vmul.f32 %v397, %v459
      %v584 = vmul.f32 %v398, %v459
      %v585 = vmul.f32 %v397, %v464
      %v586 = vmul.f32 %v398, %v464
      %v587 = vmul.f32 %v397, %v469
      %v588 = vmul.f32 %v398, %v469
      %v589 = vmul.f32 %v397, %v474
      %v590 = vmul.f32 %v398, %v474
      %v591 = vmul.f32 %v397, %v479
      %v592 = vmul.f32 %v398, %v479
      %v593 = vmul.f32 %v397, %v484
      %v594 = vmul.f32 %v398, %v484
      %v595 = vmul.f32 %v397, %v489
      %v596 = vmul.f32 %v398, %v489
      %v597 = vmul.f32 %v397, %v494
      %v598 = vmul.f32 %v398, %v494
      %v599 = vmul.f32 %v397, %v499
      %v600 = vmul.f32 %v398, %v499
      %v601 = vmul.f32 %v397, %v504
      %v602 = vmul.f32 %v398, %v504
      %v603 = vmul.f32 %v397, %v509
      %v604 = vmul.f32 %v398, %v509
      %v605 = vmul.f32 %v397, %v514
      %v606 = vmul.f32 %v398, %v514
      %v607 = vmul.f32 %v397, %v519
      %v608 = vmul.f32 %v398, %v519
      %v609 = vmul.f32 %v397, %v524
      %v610 = vmul.f32 %v398, %v524
      %v611 = vmul.f32 %v397, %v529
      %v612 = vmul.f32 %v398, %v529
      %v613 = vmul.f32 %v397, %v534
      %v614 = vmul.f32 %v398, %v534
      %v615 = vmul.f32 %v397, %v539
      %v616 = vmul.f32 %v398, %v539
      %v617 = vmul.f32 %v397, %v544
      %v618 = vmul.f32 %v398, %v544
      %v619 = vmul.f32 %v397, %v549
      %v620 = vmul.f32 %v398, %v549
      %v621 = vmul.f32 %v397, %v554
      %v622 = vmul.f32 %v398, %v554
      %v623 = vmul.f32 %v397, %v559
      %v624 = vmul.f32 %v398, %v559
      %626 = vset.pattern.permute.xlu0 0
      %627 = vperm.xlu0 %626, %v357
      %v628 = vpop.permute.xlu0 %627
      %631 = vset.pattern.permute.xlu0 0
      %632 = vperm.xlu0 %631, %v358
      %v633 = vpop.permute.xlu0 %632
      %636 = vset.pattern.permute.xlu0 0
      %637 = vperm.xlu0 %636, %v359
      %v638 = vpop.permute.xlu0 %637
      %641 = vset.pattern.permute.xlu0 0
      %642 = vperm.xlu0 %641, %v360
      %v643 = vpop.permute.xlu0 %642
      %646 = vset.pattern.permute.xlu0 0
      %647 = vperm.xlu0 %646, %v361
      %v648 = vpop.permute.xlu0 %647
      %651 = vset.pattern.permute.xlu0 0
      %652 = vperm.xlu0 %651, %v362
      %v653 = vpop.permute.xlu0 %652
      %656 = vset.pattern.permute.xlu0 0
      %657 = vperm.xlu0 %656, %v363
      %v658 = vpop.permute.xlu0 %657
      %661 = vset.pattern.permute.xlu0 0
      %662 = vperm.xlu0 %661, %v364
      %v663 = vpop.permute.xlu0 %662
      %666 = vset.pattern.permute.xlu0 0
      %667 = vperm.xlu0 %666, %v365
      %v668 = vpop.permute.xlu0 %667
      %671 = vset.pattern.permute.xlu0 0
      %672 = vperm.xlu0 %671, %v366
      %v673 = vpop.permute.xlu0 %672
      %676 = vset.pattern.permute.xlu0 0
      %677 = vperm.xlu0 %676, %v367
      %v678 = vpop.permute.xlu0 %677
      %681 = vset.pattern.permute.xlu0 0
      %682 = vperm.xlu0 %681, %v368
      %v683 = vpop.permute.xlu0 %682
      %686 = vset.pattern.permute.xlu0 0
      %687 = vperm.xlu0 %686, %v369
      %v688 = vpop.permute.xlu0 %687
      %691 = vset.pattern.permute.xlu0 0
      %692 = vperm.xlu0 %691, %v370
      %v693 = vpop.permute.xlu0 %692
      %696 = vset.pattern.permute.xlu0 0
      %697 = vperm.xlu0 %696, %v371
      %v698 = vpop.permute.xlu0 %697
      %701 = vset.pattern.permute.xlu0 0
      %702 = vperm.xlu0 %701, %v372
      %v703 = vpop.permute.xlu0 %702
      %706 = vset.pattern.permute.xlu0 0
      %707 = vperm.xlu0 %706, %v373
      %v708 = vpop.permute.xlu0 %707
      %711 = vset.pattern.permute.xlu0 0
      %712 = vperm.xlu0 %711, %v374
      %v713 = vpop.permute.xlu0 %712
      %716 = vset.pattern.permute.xlu0 0
      %717 = vperm.xlu0 %716, %v375
      %v718 = vpop.permute.xlu0 %717
      %721 = vset.pattern.permute.xlu0 0
      %722 = vperm.xlu0 %721, %v376
      %v723 = vpop.permute.xlu0 %722
      %726 = vset.pattern.permute.xlu0 0
      %727 = vperm.xlu0 %726, %v377
      %v728 = vpop.permute.xlu0 %727
      %731 = vset.pattern.permute.xlu0 0
      %732 = vperm.xlu0 %731, %v378
      %v733 = vpop.permute.xlu0 %732
      %736 = vset.pattern.permute.xlu0 0
      %737 = vperm.xlu0 %736, %v379
      %v738 = vpop.permute.xlu0 %737
      %741 = vset.pattern.permute.xlu0 0
      %742 = vperm.xlu0 %741, %v380
      %v743 = vpop.permute.xlu0 %742
      %746 = vset.pattern.permute.xlu0 0
      %747 = vperm.xlu0 %746, %v381
      %v748 = vpop.permute.xlu0 %747
      %751 = vset.pattern.permute.xlu0 0
      %752 = vperm.xlu0 %751, %v382
      %v753 = vpop.permute.xlu0 %752
      %756 = vset.pattern.permute.xlu0 0
      %757 = vperm.xlu0 %756, %v383
      %v758 = vpop.permute.xlu0 %757
      %761 = vset.pattern.permute.xlu0 0
      %762 = vperm.xlu0 %761, %v384
      %v763 = vpop.permute.xlu0 %762
      %766 = vset.pattern.permute.xlu0 0
      %767 = vperm.xlu0 %766, %v385
      %v768 = vpop.permute.xlu0 %767
      %771 = vset.pattern.permute.xlu0 0
      %772 = vperm.xlu0 %771, %v386
      %v773 = vpop.permute.xlu0 %772
      %776 = vset.pattern.permute.xlu0 0
      %777 = vperm.xlu0 %776, %v387
      %v778 = vpop.permute.xlu0 %777
      %781 = vset.pattern.permute.xlu0 0
      %782 = vperm.xlu0 %781, %v388
      %v783 = vpop.permute.xlu0 %782
      %v785 = vadd.f32 %v561, %v628
      %v786 = vadd.f32 %v562, %v628
      %v787 = vadd.f32 %v563, %v633
      %v788 = vadd.f32 %v564, %v633
      %v789 = vadd.f32 %v565, %v638
      %v790 = vadd.f32 %v566, %v638
      %v791 = vadd.f32 %v567, %v643
      %v792 = vadd.f32 %v568, %v643
      %v793 = vadd.f32 %v569, %v648
      %v794 = vadd.f32 %v570, %v648
      %v795 = vadd.f32 %v571, %v653
      %v796 = vadd.f32 %v572, %v653
      %v797 = vadd.f32 %v573, %v658
      %v798 = vadd.f32 %v574, %v658
      %v799 = vadd.f32 %v575, %v663
      %v800 = vadd.f32 %v576, %v663
      %v801 = vadd.f32 %v577, %v668
      %v802 = vadd.f32 %v578, %v668
      %v803 = vadd.f32 %v579, %v673
      %v804 = vadd.f32 %v580, %v673
      %v805 = vadd.f32 %v581, %v678
      %v806 = vadd.f32 %v582, %v678
      %v807 = vadd.f32 %v583, %v683
      %v808 = vadd.f32 %v584, %v683
      %v809 = vadd.f32 %v585, %v688
      %v810 = vadd.f32 %v586, %v688
      %v811 = vadd.f32 %v587, %v693
      %v812 = vadd.f32 %v588, %v693
      %v813 = vadd.f32 %v589, %v698
      %v814 = vadd.f32 %v590, %v698
      %v815 = vadd.f32 %v591, %v703
      %v816 = vadd.f32 %v592, %v703
      %v817 = vadd.f32 %v593, %v708
      %v818 = vadd.f32 %v594, %v708
      %v819 = vadd.f32 %v595, %v713
      %v820 = vadd.f32 %v596, %v713
      %v821 = vadd.f32 %v597, %v718
      %v822 = vadd.f32 %v598, %v718
      %v823 = vadd.f32 %v599, %v723
      %v824 = vadd.f32 %v600, %v723
      %v825 = vadd.f32 %v601, %v728
      %v826 = vadd.f32 %v602, %v728
      %v827 = vadd.f32 %v603, %v733
      %v828 = vadd.f32 %v604, %v733
      %v829 = vadd.f32 %v605, %v738
      %v830 = vadd.f32 %v606, %v738
      %v831 = vadd.f32 %v607, %v743
      %v832 = vadd.f32 %v608, %v743
      %v833 = vadd.f32 %v609, %v748
      %v834 = vadd.f32 %v610, %v748
      %v835 = vadd.f32 %v611, %v753
      %v836 = vadd.f32 %v612, %v753
      %v837 = vadd.f32 %v613, %v758
      %v838 = vadd.f32 %v614, %v758
      %v839 = vadd.f32 %v615, %v763
      %v840 = vadd.f32 %v616, %v763
      %v841 = vadd.f32 %v617, %v768
      %v842 = vadd.f32 %v618, %v768
      %v843 = vadd.f32 %v619, %v773
      %v844 = vadd.f32 %v620, %v773
      %v845 = vadd.f32 %v621, %v778
      %v846 = vadd.f32 %v622, %v778
      %v847 = vadd.f32 %v623, %v783
      %v848 = vadd.f32 %v624, %v783
      %v849 = vmax.f32 %v785, 0.0
      %v850 = vmax.f32 %v786, 0.0
      %v851 = vmax.f32 %v787, 0.0
      %v852 = vmax.f32 %v788, 0.0
      %v853 = vmax.f32 %v789, 0.0
      %v854 = vmax.f32 %v790, 0.0
      %v855 = vmax.f32 %v791, 0.0
      %v856 = vmax.f32 %v792, 0.0
      %v857 = vmax.f32 %v793, 0.0
      %v858 = vmax.f32 %v794, 0.0
      %v859 = vmax.f32 %v795, 0.0
      %v860 = vmax.f32 %v796, 0.0
      %v861 = vmax.f32 %v797, 0.0
      %v862 = vmax.f32 %v798, 0.0
      %v863 = vmax.f32 %v799, 0.0
      %v864 = vmax.f32 %v800, 0.0
      %v865 = vmax.f32 %v801, 0.0
      %v866 = vmax.f32 %v802, 0.0
      %v867 = vmax.f32 %v803, 0.0
      %v868 = vmax.f32 %v804, 0.0
      %v869 = vmax.f32 %v805, 0.0
      %v870 = vmax.f32 %v806, 0.0
      %v871 = vmax.f32 %v807, 0.0
      %v872 = vmax.f32 %v808, 0.0
      %v873 = vmax.f32 %v809, 0.0
      %v874 = vmax.f32 %v810, 0.0
      %v875 = vmax.f32 %v811, 0.0
      %v876 = vmax.f32 %v812, 0.0
      %v877 = vmax.f32 %v813, 0.0
      %v878 = vmax.f32 %v814, 0.0
      %v879 = vmax.f32 %v815, 0.0
      %v880 = vmax.f32 %v816, 0.0
      %v881 = vmax.f32 %v817, 0.0
      %v882 = vmax.f32 %v818, 0.0
      %v883 = vmax.f32 %v819, 0.0
      %v884 = vmax.f32 %v820, 0.0
      %v885 = vmax.f32 %v821, 0.0
      %v886 = vmax.f32 %v822, 0.0
      %v887 = vmax.f32 %v823, 0.0
      %v888 = vmax.f32 %v824, 0.0
      %v889 = vmax.f32 %v825, 0.0
      %v890 = vmax.f32 %v826, 0.0
      %v891 = vmax.f32 %v827, 0.0
      %v892 = vmax.f32 %v828, 0.0
      %v893 = vmax.f32 %v829, 0.0
      %v894 = vmax.f32 %v830, 0.0
      %v895 = vmax.f32 %v831, 0.0
      %v896 = vmax.f32 %v832, 0.0
      %v897 = vmax.f32 %v833, 0.0
      %v898 = vmax.f32 %v834, 0.0
      %v899 = vmax.f32 %v835, 0.0
      %v900 = vmax.f32 %v836, 0.0
      %v901 = vmax.f32 %v837, 0.0
      %v902 = vmax.f32 %v838, 0.0
      %v903 = vmax.f32 %v839, 0.0
      %v904 = vmax.f32 %v840, 0.0
      %v905 = vmax.f32 %v841, 0.0
      %v906 = vmax.f32 %v842, 0.0
      %v907 = vmax.f32 %v843, 0.0
      %v908 = vmax.f32 %v844, 0.0
      %v909 = vmax.f32 %v845, 0.0
      %v910 = vmax.f32 %v846, 0.0
      %v911 = vmax.f32 %v847, 0.0
      %v912 = vmax.f32 %v848, 0.0
      %915 = vrot.lane.b32.xlu0 %v322, 16
      %v916 = vpop.permute.xlu0 %915
      %917 = vrot.lane.b32.xlu0 %v323, 16
      %v918 = vpop.permute.xlu0 %917
      %921 = vrot.lane.b32.xlu0 %v322, 32
      %v922 = vpop.permute.xlu0 %921
      %923 = vrot.lane.b32.xlu0 %v323, 32
      %v924 = vpop.permute.xlu0 %923
      %927 = vrot.lane.b32.xlu0 %v322, 48
      %v928 = vpop.permute.xlu0 %927
      %929 = vrot.lane.b32.xlu0 %v323, 48
      %v930 = vpop.permute.xlu0 %929
      %933 = vrot.lane.b32.xlu0 %v322, 64
      %v934 = vpop.permute.xlu0 %933
      %935 = vrot.lane.b32.xlu0 %v323, 64
      %v936 = vpop.permute.xlu0 %935
      %939 = vrot.lane.b32.xlu0 %v322, 80
      %v940 = vpop.permute.xlu0 %939
      %941 = vrot.lane.b32.xlu0 %v323, 80
      %v942 = vpop.permute.xlu0 %941
      %945 = vrot.lane.b32.xlu0 %v322, 96
      %v946 = vpop.permute.xlu0 %945
      %947 = vrot.lane.b32.xlu0 %v323, 96
      %v948 = vpop.permute.xlu0 %947
      %951 = vrot.lane.b32.xlu0 %v322, 112
      %v952 = vpop.permute.xlu0 %951
      %953 = vrot.lane.b32.xlu0 %v323, 112
      %v954 = vpop.permute.xlu0 %953
      %vm957 = vcmask 130048
      %v958 = vsel %vm957, %v322, %v916
      %v959 = vsel %vm957, %v323, %v918
      %vm960 = vcmask 261120
      %v961 = vsel %vm960, %v958, %v922
      %v962 = vsel %vm960, %v959, %v924
      %vm963 = vcmask 392192
      %v964 = vsel %vm963, %v961, %v928
      %v965 = vsel %vm963, %v962, %v930
      %vm966 = vcmask 523264
      %v967 = vsel %vm966, %v964, %v934
      %v968 = vsel %vm966, %v965, %v936
      %vm969 = vcmask 654336
      %v970 = vsel %vm969, %v967, %v940
      %v971 = vsel %vm969, %v968, %v942
      %vm972 = vcmask 785408
      %v973 = vsel %vm972, %v970, %v946
      %v974 = vsel %vm972, %v971, %v948
      %vm975 = vcmask 916480
      %v976 = vsel %vm975, %v973, %v952
      %v977 = vsel %vm975, %v974, %v954
      %v980 = vrot.slane %v976, 7
      %v981 = vrot.slane %v977, 7
      %vm982 = vcmask 1040384
      %v983 = vsel %vm982, %v976, %v980
      %vm984 = vcmask 1041409
      %v985 = vsel %vm984, %v976, %v980
      %v986 = vrot.slane %v985, 1
      %vm987 = vcmask 1042434
      %v988 = vsel %vm987, %v976, %v980
      %v989 = vrot.slane %v988, 2
      %vm990 = vcmask 1043459
      %v991 = vsel %vm990, %v976, %v980
      %v992 = vrot.slane %v991, 3
      %vm993 = vcmask 1044484
      %v994 = vsel %vm993, %v976, %v980
      %v995 = vrot.slane %v994, 4
      %vm996 = vcmask 1045509
      %v997 = vsel %vm996, %v976, %v980
      %v998 = vrot.slane %v997, 5
      %vm999 = vcmask 1046534
      %v1000 = vsel %vm999, %v976, %v980
      %v1001 = vrot.slane %v1000, 6
      %vm1002 = vcmask 1046528
      %v1003 = vsel %vm1002, %v980, %v976
      %v1004 = vrot.slane %v1003, 7
      %v1005 = vsel %vm982, %v977, %v981
      %v1006 = vsel %vm984, %v977, %v981
      %v1007 = vrot.slane %v1006, 1
      %v1008 = vsel %vm987, %v977, %v981
      %v1009 = vrot.slane %v1008, 2
      %v1010 = vsel %vm990, %v977, %v981
      %v1011 = vrot.slane %v1010, 3
      %v1012 = vsel %vm993, %v977, %v981
      %v1013 = vrot.slane %v1012, 4
      %v1014 = vsel %vm996, %v977, %v981
      %v1015 = vrot.slane %v1014, 5
      %v1016 = vsel %vm999, %v977, %v981
      %v1017 = vrot.slane %v1016, 6
      %v1018 = vsel %vm1002, %v981, %v977
      %v1019 = vrot.slane %v1018, 7
      %v1020 = vperm.slane %v983, 0
      %v1021 = vperm.slane %v983, 1
      %v1022 = vperm.slane %v986, 0
      %v1023 = vperm.slane %v986, 1
      %v1024 = vperm.slane %v989, 0
      %v1025 = vperm.slane %v989, 1
      %v1026 = vperm.slane %v992, 0
      %v1027 = vperm.slane %v992, 1
      %v1028 = vperm.slane %v995, 0
      %v1029 = vperm.slane %v995, 1
      %v1030 = vperm.slane %v998, 0
      %v1031 = vperm.slane %v998, 1
      %v1032 = vperm.slane %v1001, 0
      %v1033 = vperm.slane %v1001, 1
      %v1034 = vperm.slane %v1004, 0
      %v1035 = vperm.slane %v1004, 1
      %v1036 = vperm.slane %v1005, 0
      %v1037 = vperm.slane %v1005, 1
      %v1038 = vperm.slane %v1007, 0
      %v1039 = vperm.slane %v1007, 1
      %v1040 = vperm.slane %v1009, 0
      %v1041 = vperm.slane %v1009, 1
      %v1042 = vperm.slane %v1011, 0
      %v1043 = vperm.slane %v1011, 1
      %v1044 = vperm.slane %v1013, 0
      %v1045 = vperm.slane %v1013, 1
      %v1046 = vperm.slane %v1015, 0
      %v1047 = vperm.slane %v1015, 1
      %v1048 = vperm.slane %v1017, 0
      %v1049 = vperm.slane %v1017, 1
      %v1050 = vperm.slane %v1019, 0
      %v1051 = vperm.slane %v1019, 1
      %v1084 = vmul.f32 %v849, %v1020
      %v1085 = vmul.f32 %v850, %v1021
      %v1086 = vmul.f32 %v851, %v1020
      %v1087 = vmul.f32 %v852, %v1021
      %v1088 = vmul.f32 %v853, %v1022
      %v1089 = vmul.f32 %v854, %v1023
      %v1090 = vmul.f32 %v855, %v1022
      %v1091 = vmul.f32 %v856, %v1023
      %v1092 = vmul.f32 %v857, %v1024
      %v1093 = vmul.f32 %v858, %v1025
      %v1094 = vmul.f32 %v859, %v1024
      %v1095 = vmul.f32 %v860, %v1025
      %v1096 = vmul.f32 %v861, %v1026
      %v1097 = vmul.f32 %v862, %v1027
      %v1098 = vmul.f32 %v863, %v1026
      %v1099 = vmul.f32 %v864, %v1027
      %v1100 = vmul.f32 %v865, %v1028
      %v1101 = vmul.f32 %v866, %v1029
      %v1102 = vmul.f32 %v867, %v1028
      %v1103 = vmul.f32 %v868, %v1029
      %v1104 = vmul.f32 %v869, %v1030
      %v1105 = vmul.f32 %v870, %v1031
      %v1106 = vmul.f32 %v871, %v1030
      %v1107 = vmul.f32 %v872, %v1031
      %v1108 = vmul.f32 %v873, %v1032
      %v1109 = vmul.f32 %v874, %v1033
      %v1110 = vmul.f32 %v875, %v1032
      %v1111 = vmul.f32 %v876, %v1033
      %v1112 = vmul.f32 %v877, %v1034
      %v1113 = vmul.f32 %v878, %v1035
      %v1114 = vmul.f32 %v879, %v1034
      %v1115 = vmul.f32 %v880, %v1035
      %v1116 = vmul.f32 %v881, %v1036
      %v1117 = vmul.f32 %v882, %v1037
      %v1118 = vmul.f32 %v883, %v1036
      %v1119 = vmul.f32 %v884, %v1037
      %v1120 = vmul.f32 %v885, %v1038
      %v1121 = vmul.f32 %v886, %v1039
      %v1122 = vmul.f32 %v887, %v1038
      %v1123 = vmul.f32 %v888, %v1039
      %v1124 = vmul.f32 %v889, %v1040
      %v1125 = vmul.f32 %v890, %v1041
      %v1126 = vmul.f32 %v891, %v1040
      %v1127 = vmul.f32 %v892, %v1041
      %v1128 = vmul.f32 %v893, %v1042
      %v1129 = vmul.f32 %v894, %v1043
      %v1130 = vmul.f32 %v895, %v1042
      %v1131 = vmul.f32 %v896, %v1043
      %v1132 = vmul.f32 %v897, %v1044
      %v1133 = vmul.f32 %v898, %v1045
      %v1134 = vmul.f32 %v899, %v1044
      %v1135 = vmul.f32 %v900, %v1045
      %v1136 = vmul.f32 %v901, %v1046
      %v1137 = vmul.f32 %v902, %v1047
      %v1138 = vmul.f32 %v903, %v1046
      %v1139 = vmul.f32 %v904, %v1047
      %v1140 = vmul.f32 %v905, %v1048
      %v1141 = vmul.f32 %v906, %v1049
      %v1142 = vmul.f32 %v907, %v1048
      %v1143 = vmul.f32 %v908, %v1049
      %v1144 = vmul.f32 %v909, %v1050
      %v1145 = vmul.f32 %v910, %v1051
      %v1146 = vmul.f32 %v911, %v1050
      %v1147 = vmul.f32 %v912, %v1051
      %v1148 = vadd.f32 %v1084, %v1088
      %v1149 = vadd.f32 %v1148, %v1092
      %v1150 = vadd.f32 %v1149, %v1096
      %v1151 = vadd.f32 %v1150, %v1100
      %v1152 = vadd.f32 %v1151, %v1104
      %v1153 = vadd.f32 %v1152, %v1108
      %v1154 = vadd.f32 %v1153, %v1112
      %v1155 = vadd.f32 %v1154, %v1116
      %v1156 = vadd.f32 %v1155, %v1120
      %v1157 = vadd.f32 %v1156, %v1124
      %v1158 = vadd.f32 %v1157, %v1128
      %v1159 = vadd.f32 %v1158, %v1132
      %v1160 = vadd.f32 %v1159, %v1136
      %v1161 = vadd.f32 %v1160, %v1140
      %v1162 = vadd.f32 %v1161, %v1144
      %v1163 = vadd.f32 %v1085, %v1089
      %v1164 = vadd.f32 %v1163, %v1093
      %v1165 = vadd.f32 %v1164, %v1097
      %v1166 = vadd.f32 %v1165, %v1101
      %v1167 = vadd.f32 %v1166, %v1105
      %v1168 = vadd.f32 %v1167, %v1109
      %v1169 = vadd.f32 %v1168, %v1113
      %v1170 = vadd.f32 %v1169, %v1117
      %v1171 = vadd.f32 %v1170, %v1121
      %v1172 = vadd.f32 %v1171, %v1125
      %v1173 = vadd.f32 %v1172, %v1129
      %v1174 = vadd.f32 %v1173, %v1133
      %v1175 = vadd.f32 %v1174, %v1137
      %v1176 = vadd.f32 %v1175, %v1141
      %v1177 = vadd.f32 %v1176, %v1145
      %v1178 = vadd.f32 %v1086, %v1090
      %v1179 = vadd.f32 %v1178, %v1094
      %v1180 = vadd.f32 %v1179, %v1098
      %v1181 = vadd.f32 %v1180, %v1102
      %v1182 = vadd.f32 %v1181, %v1106
      %v1183 = vadd.f32 %v1182, %v1110
      %v1184 = vadd.f32 %v1183, %v1114
      %v1185 = vadd.f32 %v1184, %v1118
      %v1186 = vadd.f32 %v1185, %v1122
      %v1187 = vadd.f32 %v1186, %v1126
      %v1188 = vadd.f32 %v1187, %v1130
      %v1189 = vadd.f32 %v1188, %v1134
      %v1190 = vadd.f32 %v1189, %v1138
      %v1191 = vadd.f32 %v1190, %v1142
      %v1192 = vadd.f32 %v1191, %v1146
      %v1193 = vadd.f32 %v1087, %v1091
      %v1194 = vadd.f32 %v1193, %v1095
      %v1195 = vadd.f32 %v1194, %v1099
      %v1196 = vadd.f32 %v1195, %v1103
      %v1197 = vadd.f32 %v1196, %v1107
      %v1198 = vadd.f32 %v1197, %v1111
      %v1199 = vadd.f32 %v1198, %v1115
      %v1200 = vadd.f32 %v1199, %v1119
      %v1201 = vadd.f32 %v1200, %v1123
      %v1202 = vadd.f32 %v1201, %v1127
      %v1203 = vadd.f32 %v1202, %v1131
      %v1204 = vadd.f32 %v1203, %v1135
      %v1205 = vadd.f32 %v1204, %v1139
      %v1206 = vadd.f32 %v1205, %v1143
      %v1207 = vadd.f32 %v1206, %v1147
      %1208 = vmatpush.msra.mxu0 %v305
      %1209 = vmatpush.msra.mxu0 %v304
      %1210 = vmatpush.msra.mxu0 %v303
      %1211 = vmatpush.msra.mxu0 %v302
      %1212 = vmatpush.msra.mxu0 %v301
      %1213 = vmatpush.msra.mxu0 %v300
      %1214 = vmatpush.msra.mxu0 %v299
      %1215 = vmatpush.msra.mxu0 %v298
      %1216 = vmatpush.msra.mxu0 %v297
      %1217 = vmatpush.msra.mxu0 %v296
      %1218 = vmatpush.msra.mxu0 %v295
      %1219 = vmatpush.msra.mxu0 %v294
      %1220 = vmatpush.msra.mxu0 %v293
      %1221 = vmatpush.msra.mxu0 %v292
      %1222 = vmatpush.msra.mxu0 %v291
      %1223 = vmatpush.msra.mxu0 %v290
      %1224 = vmatmul.f32.gmra.mxu0 %v1162
      %v1225 = vpop.f32.mrf.mxu0
      %v1226 = vadd.f32 0.0, %v1225
      %1227 = vmatmul.f32.gmra.mxu0 %v1192
      %v1228 = vpop.f32.mrf.mxu0
      %v1229 = vadd.f32 0.0, %v1228
      %1230 = vdwg.mxu0
      %1231 = vmatpush.msra.mxu0 %v321
      %1232 = vmatpush.msra.mxu0 %v320
      %1233 = vmatpush.msra.mxu0 %v319
      %1234 = vmatpush.msra.mxu0 %v318
      %1235 = vmatpush.msra.mxu0 %v317
      %1236 = vmatpush.msra.mxu0 %v316
      %1237 = vmatpush.msra.mxu0 %v315
      %1238 = vmatpush.msra.mxu0 %v314
      %1239 = vmatpush.msra.mxu0 %v313
      %1240 = vmatpush.msra.mxu0 %v312
      %1241 = vmatpush.msra.mxu0 %v311
      %1242 = vmatpush.msra.mxu0 %v310
      %1243 = vmatpush.msra.mxu0 %v309
      %1244 = vmatpush.msra.mxu0 %v308
      %1245 = vmatpush.msra.mxu0 %v307
      %1246 = vmatpush.msra.mxu0 %v306
      %1247 = vmatmul.f32.gmra.mxu0 %v1177
      %v1248 = vpop.f32.mrf.mxu0
      %v1249 = vadd.f32 %v1226, %v1248
      %1250 = vmatmul.f32.gmra.mxu0 %v1207
      %v1251 = vpop.f32.mrf.mxu0
      %v1252 = vadd.f32 %v1229, %v1251
      %1253 = vdwg.mxu0
      %v1255 = vsel %vm957, %v389, 0
      %v1258 = vsel %vm957, %v390, 0
      %1260 = vmatpush.msra.mxu0 0.0
      %1261 = vmatpush.msra.mxu0 0.0
      %1262 = vmatpush.msra.mxu0 0.0
      %1263 = vmatpush.msra.mxu0 0.0
      %1264 = vmatpush.msra.mxu0 0.0
      %1265 = vmatpush.msra.mxu0 0.0
      %1266 = vmatpush.msra.mxu0 0.0
      %1267 = vmatpush.msra.mxu0 0.0
      %1268 = vmatpush.msra.mxu0 0.0
      %1269 = vmatpush.msra.mxu0 0.0
      %1270 = vmatpush.msra.mxu0 0.0
      %1271 = vmatpush.msra.mxu0 0.0
      %1272 = vmatpush.msra.mxu0 0.0
      %1273 = vmatpush.msra.mxu0 0.0
      %1274 = vmatpush.msra.mxu0 %v323
      %1275 = vmatpush.msra.mxu0 %v322
      %1276 = vmatmul.f32.gmra.mxu0 %v1255
      %v1277 = vpop.f32.mrf.mxu0
      %v1278 = vadd.f32 0.0, %v1277
      %1279 = vmatmul.f32.gmra.mxu0 %v1258
      %v1280 = vpop.f32.mrf.mxu0
      %v1281 = vadd.f32 0.0, %v1280
      %1282 = vdwg.mxu0
      %1284 = vset.pattern.permute.xlu0 0
      %1285 = vperm.xlu0 %1284, %v391
      %v1286 = vpop.permute.xlu0 %1285
      %1289 = vset.pattern.permute.xlu0 0
      %1290 = vperm.xlu0 %1289, %v392
      %v1291 = vpop.permute.xlu0 %1290
      %v1293 = vmul.f32 %v1249, %v1286
      %v1294 = vmul.f32 %v1252, %v1291
      %v1295 = vadd.f32 %v1293, %v1278
      %v1296 = vadd.f32 %v1294, %v1281
      %1298 = vset.pattern.permute.xlu0 0
      %1299 = vperm.xlu0 %1298, %v394
      %v1300 = vpop.permute.xlu0 %1299
      %1303 = vset.pattern.permute.xlu0 0
      %1304 = vperm.xlu0 %1303, %v395
      %v1305 = vpop.permute.xlu0 %1304
      %v1307 = vadd.f32 %v1295, %v1300
      %v1308 = vadd.f32 %v1296, %v1305
      %v1309 = vxor.u32 %v1307, 2147483648
      %v1310 = vxor.u32 %v1308, 2147483648
      %v1311 = vmul.f32 %v1309, 1.442695
      %v1312 = vpow.pop %v1311
      %v1313 = vmul.f32 %v1310, 1.442695
      %v1314 = vpow.pop %v1313
      %v1315 = vadd.f32 %v1312, 1.0
      %v1316 = vadd.f32 %v1314, 1.0
      %v1317 = vrcp.pop %v1315
      %v1318 = vmul.f32 %v1315, %v1317
      %v1319 = vsub.f32 1.0, %v1318
      %v1320 = vmul.f32 %v1317, %v1319
      %v1321 = vadd.f32 %v1317, %v1320
      %vm1322 = vweird.f32 %v1315
      %vm1323 = vweird.f32 %v1317
      %vm1324 = vmor %vm1322, %vm1323
      %v1325 = vsel %vm1324, %v1317, %v1321
      %v1326 = vand.u32 2147483647, %v1315
      %vm1327 = vcmp.eq.f32.partialorder %v1326, 8.507059e+37
      %v1328 = vand.u32 %v1315, 2147483648
      %v1329 = vor.u32 1.1754944e-38, %v1328
      %v1330 = vsel %vm1327, %v1329, %v1325
      %v1331 = vmul.f32 1.0, %v1330
      %v1332 = vrcp.pop %v1316
      %v1333 = vmul.f32 %v1316, %v1332
      %v1334 = vsub.f32 1.0, %v1333
      %v1335 = vmul.f32 %v1332, %v1334
      %v1336 = vadd.f32 %v1332, %v1335
      %vm1337 = vweird.f32 %v1316
      %vm1338 = vweird.f32 %v1332
      %vm1339 = vmor %vm1337, %vm1338
      %v1340 = vsel %vm1339, %v1332, %v1336
      %v1341 = vand.u32 2147483647, %v1316
      %vm1342 = vcmp.eq.f32.partialorder %v1341, 8.507059e+37
      %v1343 = vand.u32 %v1316, 2147483648
      %v1344 = vor.u32 1.1754944e-38, %v1343
      %v1345 = vsel %vm1342, %v1344, %v1340
      %v1346 = vmul.f32 1.0, %v1345
      %s1347 = scalar_lea.vmem %s3, 512
      %v1348 = vld [vmem:[%s1347] sm:$0xff]
      %v1349 = vld [vmem:[%s1347 + $0x8] sm:$0xff]
      %v1350 = vld [vmem:[%s1347 + $0x10] sm:$0xff]
      %v1351 = vld [vmem:[%s1347 + $0x18] sm:$0xff]
      %v1352 = vld [vmem:[%s1347 + $0x20] sm:$0xff]
      %v1353 = vld [vmem:[%s1347 + $0x28] sm:$0xff]
      %v1354 = vld [vmem:[%s1347 + $0x30] sm:$0xff]
      %v1355 = vld [vmem:[%s1347 + $0x38] sm:$0xff]
      %v1356 = vld [vmem:[%s1347 + $0x40] sm:$0xff]
      %v1357 = vld [vmem:[%s1347 + $0x48] sm:$0xff]
      %v1358 = vld [vmem:[%s1347 + $0x50] sm:$0xff]
      %v1359 = vld [vmem:[%s1347 + $0x58] sm:$0xff]
      %v1360 = vld [vmem:[%s1347 + $0x60] sm:$0xff]
      %v1361 = vld [vmem:[%s1347 + $0x68] sm:$0xff]
      %v1362 = vld [vmem:[%s1347 + $0x70] sm:$0xff]
      %v1363 = vld [vmem:[%s1347 + $0x78] sm:$0xff]
      %v1364 = vld [vmem:[%s1347 + $0x80] sm:$0xff]
      %v1365 = vld [vmem:[%s1347 + $0x88] sm:$0xff]
      %v1366 = vld [vmem:[%s1347 + $0x90] sm:$0xff]
      %v1367 = vld [vmem:[%s1347 + $0x98] sm:$0xff]
      %v1368 = vld [vmem:[%s1347 + $0xa0] sm:$0xff]
      %v1369 = vld [vmem:[%s1347 + $0xa8] sm:$0xff]
      %v1370 = vld [vmem:[%s1347 + $0xb0] sm:$0xff]
      %v1371 = vld [vmem:[%s1347 + $0xb8] sm:$0xff]
      %v1372 = vld [vmem:[%s1347 + $0xc0] sm:$0xff]
      %v1373 = vld [vmem:[%s1347 + $0xc8] sm:$0xff]
      %v1374 = vld [vmem:[%s1347 + $0xd0] sm:$0xff]
      %v1375 = vld [vmem:[%s1347 + $0xd8] sm:$0xff]
      %v1376 = vld [vmem:[%s1347 + $0xe0] sm:$0xff]
      %v1377 = vld [vmem:[%s1347 + $0xe8] sm:$0xff]
      %v1378 = vld [vmem:[%s1347 + $0xf0] sm:$0xff]
      %v1379 = vld [vmem:[%s1347 + $0xf8] sm:$0xff]
      %s1380 = scalar_lea.vmem %s3, 768
      %v1381 = vld [vmem:[%s1380] sm:$0xff]
      %v1382 = vld [vmem:[%s1380 + $0x8] sm:$0xff]
      %v1383 = vld [vmem:[%s1380 + $0x10] sm:$0xff]
      %v1384 = vld [vmem:[%s1380 + $0x18] sm:$0xff]
      %v1385 = vld [vmem:[%s1380 + $0x20] sm:$0xff]
      %v1386 = vld [vmem:[%s1380 + $0x28] sm:$0xff]
      %v1387 = vld [vmem:[%s1380 + $0x30] sm:$0xff]
      %v1388 = vld [vmem:[%s1380 + $0x38] sm:$0xff]
      %v1389 = vld [vmem:[%s1380 + $0x40] sm:$0xff]
      %v1390 = vld [vmem:[%s1380 + $0x48] sm:$0xff]
      %v1391 = vld [vmem:[%s1380 + $0x50] sm:$0xff]
      %v1392 = vld [vmem:[%s1380 + $0x58] sm:$0xff]
      %v1393 = vld [vmem:[%s1380 + $0x60] sm:$0xff]
      %v1394 = vld [vmem:[%s1380 + $0x68] sm:$0xff]
      %v1395 = vld [vmem:[%s1380 + $0x70] sm:$0xff]
      %v1396 = vld [vmem:[%s1380 + $0x78] sm:$0xff]
      %v1397 = vld [vmem:[%s1380 + $0x80] sm:$0xff]
      %v1398 = vld [vmem:[%s1380 + $0x88] sm:$0xff]
      %v1399 = vld [vmem:[%s1380 + $0x90] sm:$0xff]
      %v1400 = vld [vmem:[%s1380 + $0x98] sm:$0xff]
      %v1401 = vld [vmem:[%s1380 + $0xa0] sm:$0xff]
      %v1402 = vld [vmem:[%s1380 + $0xa8] sm:$0xff]
      %v1403 = vld [vmem:[%s1380 + $0xb0] sm:$0xff]
      %v1404 = vld [vmem:[%s1380 + $0xb8] sm:$0xff]
      %v1405 = vld [vmem:[%s1380 + $0xc0] sm:$0xff]
      %v1406 = vld [vmem:[%s1380 + $0xc8] sm:$0xff]
      %v1407 = vld [vmem:[%s1380 + $0xd0] sm:$0xff]
      %v1408 = vld [vmem:[%s1380 + $0xd8] sm:$0xff]
      %v1409 = vld [vmem:[%s1380 + $0xe0] sm:$0xff]
      %v1410 = vld [vmem:[%s1380 + $0xe8] sm:$0xff]
      %v1411 = vld [vmem:[%s1380 + $0xf0] sm:$0xff]
      %v1412 = vld [vmem:[%s1380 + $0xf8] sm:$0xff]
      %s1413 = scalar_lea.vmem %s4, 16
      %v1414 = vld [vmem:[%s1413] sm:$0xff]
      %v1415 = vld [vmem:[%s1413 + $0x8] sm:$0xff]
      %s1416 = scalar_lea.vmem %s5, 32
      %v1417 = vld [vmem:[%s1416] sm:$0xff]
      %v1418 = vld [vmem:[%s1416 + $0x8] sm:$0xff]
      %s1419 = scalar_lea.vmem %s5, 48
      %v1420 = vld [vmem:[%s1419] sm:$0xff]
      %v1421 = vld [vmem:[%s1419 + $0x8] sm:$0xff]
      %1423 = vset.pattern.permute.xlu0 0
      %1424 = vperm.xlu0 %1423, %v1348
      %v1425 = vpop.permute.xlu0 %1424
      %1428 = vset.pattern.permute.xlu0 0
      %1429 = vperm.xlu0 %1428, %v1349
      %v1430 = vpop.permute.xlu0 %1429
      %1433 = vset.pattern.permute.xlu0 0
      %1434 = vperm.xlu0 %1433, %v1350
      %v1435 = vpop.permute.xlu0 %1434
      %1438 = vset.pattern.permute.xlu0 0
      %1439 = vperm.xlu0 %1438, %v1351
      %v1440 = vpop.permute.xlu0 %1439
      %1443 = vset.pattern.permute.xlu0 0
      %1444 = vperm.xlu0 %1443, %v1352
      %v1445 = vpop.permute.xlu0 %1444
      %1448 = vset.pattern.permute.xlu0 0
      %1449 = vperm.xlu0 %1448, %v1353
      %v1450 = vpop.permute.xlu0 %1449
      %1453 = vset.pattern.permute.xlu0 0
      %1454 = vperm.xlu0 %1453, %v1354
      %v1455 = vpop.permute.xlu0 %1454
      %1458 = vset.pattern.permute.xlu0 0
      %1459 = vperm.xlu0 %1458, %v1355
      %v1460 = vpop.permute.xlu0 %1459
      %1463 = vset.pattern.permute.xlu0 0
      %1464 = vperm.xlu0 %1463, %v1356
      %v1465 = vpop.permute.xlu0 %1464
      %1468 = vset.pattern.permute.xlu0 0
      %1469 = vperm.xlu0 %1468, %v1357
      %v1470 = vpop.permute.xlu0 %1469
      %1473 = vset.pattern.permute.xlu0 0
      %1474 = vperm.xlu0 %1473, %v1358
      %v1475 = vpop.permute.xlu0 %1474
      %1478 = vset.pattern.permute.xlu0 0
      %1479 = vperm.xlu0 %1478, %v1359
      %v1480 = vpop.permute.xlu0 %1479
      %1483 = vset.pattern.permute.xlu0 0
      %1484 = vperm.xlu0 %1483, %v1360
      %v1485 = vpop.permute.xlu0 %1484
      %1488 = vset.pattern.permute.xlu0 0
      %1489 = vperm.xlu0 %1488, %v1361
      %v1490 = vpop.permute.xlu0 %1489
      %1493 = vset.pattern.permute.xlu0 0
      %1494 = vperm.xlu0 %1493, %v1362
      %v1495 = vpop.permute.xlu0 %1494
      %1498 = vset.pattern.permute.xlu0 0
      %1499 = vperm.xlu0 %1498, %v1363
      %v1500 = vpop.permute.xlu0 %1499
      %1503 = vset.pattern.permute.xlu0 0
      %1504 = vperm.xlu0 %1503, %v1364
      %v1505 = vpop.permute.xlu0 %1504
      %1508 = vset.pattern.permute.xlu0 0
      %1509 = vperm.xlu0 %1508, %v1365
      %v1510 = vpop.permute.xlu0 %1509
      %1513 = vset.pattern.permute.xlu0 0
      %1514 = vperm.xlu0 %1513, %v1366
      %v1515 = vpop.permute.xlu0 %1514
      %1518 = vset.pattern.permute.xlu0 0
      %1519 = vperm.xlu0 %1518, %v1367
      %v1520 = vpop.permute.xlu0 %1519
      %1523 = vset.pattern.permute.xlu0 0
      %1524 = vperm.xlu0 %1523, %v1368
      %v1525 = vpop.permute.xlu0 %1524
      %1528 = vset.pattern.permute.xlu0 0
      %1529 = vperm.xlu0 %1528, %v1369
      %v1530 = vpop.permute.xlu0 %1529
      %1533 = vset.pattern.permute.xlu0 0
      %1534 = vperm.xlu0 %1533, %v1370
      %v1535 = vpop.permute.xlu0 %1534
      %1538 = vset.pattern.permute.xlu0 0
      %1539 = vperm.xlu0 %1538, %v1371
      %v1540 = vpop.permute.xlu0 %1539
      %1543 = vset.pattern.permute.xlu0 0
      %1544 = vperm.xlu0 %1543, %v1372
      %v1545 = vpop.permute.xlu0 %1544
      %1548 = vset.pattern.permute.xlu0 0
      %1549 = vperm.xlu0 %1548, %v1373
      %v1550 = vpop.permute.xlu0 %1549
      %1553 = vset.pattern.permute.xlu0 0
      %1554 = vperm.xlu0 %1553, %v1374
      %v1555 = vpop.permute.xlu0 %1554
      %1558 = vset.pattern.permute.xlu0 0
      %1559 = vperm.xlu0 %1558, %v1375
      %v1560 = vpop.permute.xlu0 %1559
      %1563 = vset.pattern.permute.xlu0 0
      %1564 = vperm.xlu0 %1563, %v1376
      %v1565 = vpop.permute.xlu0 %1564
      %1568 = vset.pattern.permute.xlu0 0
      %1569 = vperm.xlu0 %1568, %v1377
      %v1570 = vpop.permute.xlu0 %1569
      %1573 = vset.pattern.permute.xlu0 0
      %1574 = vperm.xlu0 %1573, %v1378
      %v1575 = vpop.permute.xlu0 %1574
      %1578 = vset.pattern.permute.xlu0 0
      %1579 = vperm.xlu0 %1578, %v1379
      %v1580 = vpop.permute.xlu0 %1579
      %v1582 = vmul.f32 %v397, %v1425
      %v1583 = vmul.f32 %v398, %v1425
      %v1584 = vmul.f32 %v397, %v1430
      %v1585 = vmul.f32 %v398, %v1430
      %v1586 = vmul.f32 %v397, %v1435
      %v1587 = vmul.f32 %v398, %v1435
      %v1588 = vmul.f32 %v397, %v1440
      %v1589 = vmul.f32 %v398, %v1440
      %v1590 = vmul.f32 %v397, %v1445
      %v1591 = vmul.f32 %v398, %v1445
      %v1592 = vmul.f32 %v397, %v1450
      %v1593 = vmul.f32 %v398, %v1450
      %v1594 = vmul.f32 %v397, %v1455
      %v1595 = vmul.f32 %v398, %v1455
      %v1596 = vmul.f32 %v397, %v1460
      %v1597 = vmul.f32 %v398, %v1460
      %v1598 = vmul.f32 %v397, %v1465
      %v1599 = vmul.f32 %v398, %v1465
      %v1600 = vmul.f32 %v397, %v1470
      %v1601 = vmul.f32 %v398, %v1470
      %v1602 = vmul.f32 %v397, %v1475
      %v1603 = vmul.f32 %v398, %v1475
      %v1604 = vmul.f32 %v397, %v1480
      %v1605 = vmul.f32 %v398, %v1480
      %v1606 = vmul.f32 %v397, %v1485
      %v1607 = vmul.f32 %v398, %v1485
      %v1608 = vmul.f32 %v397, %v1490
      %v1609 = vmul.f32 %v398, %v1490
      %v1610 = vmul.f32 %v397, %v1495
      %v1611 = vmul.f32 %v398, %v1495
      %v1612 = vmul.f32 %v397, %v1500
      %v1613 = vmul.f32 %v398, %v1500
      %v1614 = vmul.f32 %v397, %v1505
      %v1615 = vmul.f32 %v398, %v1505
      %v1616 = vmul.f32 %v397, %v1510
      %v1617 = vmul.f32 %v398, %v1510
      %v1618 = vmul.f32 %v397, %v1515
      %v1619 = vmul.f32 %v398, %v1515
      %v1620 = vmul.f32 %v397, %v1520
      %v1621 = vmul.f32 %v398, %v1520
      %v1622 = vmul.f32 %v397, %v1525
      %v1623 = vmul.f32 %v398, %v1525
      %v1624 = vmul.f32 %v397, %v1530
      %v1625 = vmul.f32 %v398, %v1530
      %v1626 = vmul.f32 %v397, %v1535
      %v1627 = vmul.f32 %v398, %v1535
      %v1628 = vmul.f32 %v397, %v1540
      %v1629 = vmul.f32 %v398, %v1540
      %v1630 = vmul.f32 %v397, %v1545
      %v1631 = vmul.f32 %v398, %v1545
      %v1632 = vmul.f32 %v397, %v1550
      %v1633 = vmul.f32 %v398, %v1550
      %v1634 = vmul.f32 %v397, %v1555
      %v1635 = vmul.f32 %v398, %v1555
      %v1636 = vmul.f32 %v397, %v1560
      %v1637 = vmul.f32 %v398, %v1560
      %v1638 = vmul.f32 %v397, %v1565
      %v1639 = vmul.f32 %v398, %v1565
      %v1640 = vmul.f32 %v397, %v1570
      %v1641 = vmul.f32 %v398, %v1570
      %v1642 = vmul.f32 %v397, %v1575
      %v1643 = vmul.f32 %v398, %v1575
      %v1644 = vmul.f32 %v397, %v1580
      %v1645 = vmul.f32 %v398, %v1580
      %1647 = vset.pattern.permute.xlu0 0
      %1648 = vperm.xlu0 %1647, %v1381
      %v1649 = vpop.permute.xlu0 %1648
      %1652 = vset.pattern.permute.xlu0 0
      %1653 = vperm.xlu0 %1652, %v1382
      %v1654 = vpop.permute.xlu0 %1653
      %1657 = vset.pattern.permute.xlu0 0
      %1658 = vperm.xlu0 %1657, %v1383
      %v1659 = vpop.permute.xlu0 %1658
      %1662 = vset.pattern.permute.xlu0 0
      %1663 = vperm.xlu0 %1662, %v1384
      %v1664 = vpop.permute.xlu0 %1663
      %1667 = vset.pattern.permute.xlu0 0
      %1668 = vperm.xlu0 %1667, %v1385
      %v1669 = vpop.permute.xlu0 %1668
      %1672 = vset.pattern.permute.xlu0 0
      %1673 = vperm.xlu0 %1672, %v1386
      %v1674 = vpop.permute.xlu0 %1673
      %1677 = vset.pattern.permute.xlu0 0
      %1678 = vperm.xlu0 %1677, %v1387
      %v1679 = vpop.permute.xlu0 %1678
      %1682 = vset.pattern.permute.xlu0 0
      %1683 = vperm.xlu0 %1682, %v1388
      %v1684 = vpop.permute.xlu0 %1683
      %1687 = vset.pattern.permute.xlu0 0
      %1688 = vperm.xlu0 %1687, %v1389
      %v1689 = vpop.permute.xlu0 %1688
      %1692 = vset.pattern.permute.xlu0 0
      %1693 = vperm.xlu0 %1692, %v1390
      %v1694 = vpop.permute.xlu0 %1693
      %1697 = vset.pattern.permute.xlu0 0
      %1698 = vperm.xlu0 %1697, %v1391
      %v1699 = vpop.permute.xlu0 %1698
      %1702 = vset.pattern.permute.xlu0 0
      %1703 = vperm.xlu0 %1702, %v1392
      %v1704 = vpop.permute.xlu0 %1703
      %1707 = vset.pattern.permute.xlu0 0
      %1708 = vperm.xlu0 %1707, %v1393
      %v1709 = vpop.permute.xlu0 %1708
      %1712 = vset.pattern.permute.xlu0 0
      %1713 = vperm.xlu0 %1712, %v1394
      %v1714 = vpop.permute.xlu0 %1713
      %1717 = vset.pattern.permute.xlu0 0
      %1718 = vperm.xlu0 %1717, %v1395
      %v1719 = vpop.permute.xlu0 %1718
      %1722 = vset.pattern.permute.xlu0 0
      %1723 = vperm.xlu0 %1722, %v1396
      %v1724 = vpop.permute.xlu0 %1723
      %1727 = vset.pattern.permute.xlu0 0
      %1728 = vperm.xlu0 %1727, %v1397
      %v1729 = vpop.permute.xlu0 %1728
      %1732 = vset.pattern.permute.xlu0 0
      %1733 = vperm.xlu0 %1732, %v1398
      %v1734 = vpop.permute.xlu0 %1733
      %1737 = vset.pattern.permute.xlu0 0
      %1738 = vperm.xlu0 %1737, %v1399
      %v1739 = vpop.permute.xlu0 %1738
      %1742 = vset.pattern.permute.xlu0 0
      %1743 = vperm.xlu0 %1742, %v1400
      %v1744 = vpop.permute.xlu0 %1743
      %1747 = vset.pattern.permute.xlu0 0
      %1748 = vperm.xlu0 %1747, %v1401
      %v1749 = vpop.permute.xlu0 %1748
      %1752 = vset.pattern.permute.xlu0 0
      %1753 = vperm.xlu0 %1752, %v1402
      %v1754 = vpop.permute.xlu0 %1753
      %1757 = vset.pattern.permute.xlu0 0
      %1758 = vperm.xlu0 %1757, %v1403
      %v1759 = vpop.permute.xlu0 %1758
      %1762 = vset.pattern.permute.xlu0 0
      %1763 = vperm.xlu0 %1762, %v1404
      %v1764 = vpop.permute.xlu0 %1763
      %1767 = vset.pattern.permute.xlu0 0
      %1768 = vperm.xlu0 %1767, %v1405
      %v1769 = vpop.permute.xlu0 %1768
      %1772 = vset.pattern.permute.xlu0 0
      %1773 = vperm.xlu0 %1772, %v1406
      %v1774 = vpop.permute.xlu0 %1773
      %1777 = vset.pattern.permute.xlu0 0
      %1778 = vperm.xlu0 %1777, %v1407
      %v1779 = vpop.permute.xlu0 %1778
      %1782 = vset.pattern.permute.xlu0 0
      %1783 = vperm.xlu0 %1782, %v1408
      %v1784 = vpop.permute.xlu0 %1783
      %1787 = vset.pattern.permute.xlu0 0
      %1788 = vperm.xlu0 %1787, %v1409
      %v1789 = vpop.permute.xlu0 %1788
      %1792 = vset.pattern.permute.xlu0 0
      %1793 = vperm.xlu0 %1792, %v1410
      %v1794 = vpop.permute.xlu0 %1793
      %1797 = vset.pattern.permute.xlu0 0
      %1798 = vperm.xlu0 %1797, %v1411
      %v1799 = vpop.permute.xlu0 %1798
      %1802 = vset.pattern.permute.xlu0 0
      %1803 = vperm.xlu0 %1802, %v1412
      %v1804 = vpop.permute.xlu0 %1803
      %v1806 = vadd.f32 %v1582, %v1649
      %v1807 = vadd.f32 %v1583, %v1649
      %v1808 = vadd.f32 %v1584, %v1654
      %v1809 = vadd.f32 %v1585, %v1654
      %v1810 = vadd.f32 %v1586, %v1659
      %v1811 = vadd.f32 %v1587, %v1659
      %v1812 = vadd.f32 %v1588, %v1664
      %v1813 = vadd.f32 %v1589, %v1664
      %v1814 = vadd.f32 %v1590, %v1669
      %v1815 = vadd.f32 %v1591, %v1669
      %v1816 = vadd.f32 %v1592, %v1674
      %v1817 = vadd.f32 %v1593, %v1674
      %v1818 = vadd.f32 %v1594, %v1679
      %v1819 = vadd.f32 %v1595, %v1679
      %v1820 = vadd.f32 %v1596, %v1684
      %v1821 = vadd.f32 %v1597, %v1684
      %v1822 = vadd.f32 %v1598, %v1689
      %v1823 = vadd.f32 %v1599, %v1689
      %v1824 = vadd.f32 %v1600, %v1694
      %v1825 = vadd.f32 %v1601, %v1694
      %v1826 = vadd.f32 %v1602, %v1699
      %v1827 = vadd.f32 %v1603, %v1699
      %v1828 = vadd.f32 %v1604, %v1704
      %v1829 = vadd.f32 %v1605, %v1704
      %v1830 = vadd.f32 %v1606, %v1709
      %v1831 = vadd.f32 %v1607, %v1709
      %v1832 = vadd.f32 %v1608, %v1714
      %v1833 = vadd.f32 %v1609, %v1714
      %v1834 = vadd.f32 %v1610, %v1719
      %v1835 = vadd.f32 %v1611, %v1719
      %v1836 = vadd.f32 %v1612, %v1724
      %v1837 = vadd.f32 %v1613, %v1724
      %v1838 = vadd.f32 %v1614, %v1729
      %v1839 = vadd.f32 %v1615, %v1729
      %v1840 = vadd.f32 %v1616, %v1734
      %v1841 = vadd.f32 %v1617, %v1734
      %v1842 = vadd.f32 %v1618, %v1739
      %v1843 = vadd.f32 %v1619, %v1739
      %v1844 = vadd.f32 %v1620, %v1744
      %v1845 = vadd.f32 %v1621, %v1744
      %v1846 = vadd.f32 %v1622, %v1749
      %v1847 = vadd.f32 %v1623, %v1749
      %v1848 = vadd.f32 %v1624, %v1754
      %v1849 = vadd.f32 %v1625, %v1754
      %v1850 = vadd.f32 %v1626, %v1759
      %v1851 = vadd.f32 %v1627, %v1759
      %v1852 = vadd.f32 %v1628, %v1764
      %v1853 = vadd.f32 %v1629, %v1764
      %v1854 = vadd.f32 %v1630, %v1769
      %v1855 = vadd.f32 %v1631, %v1769
      %v1856 = vadd.f32 %v1632, %v1774
      %v1857 = vadd.f32 %v1633, %v1774
      %v1858 = vadd.f32 %v1634, %v1779
      %v1859 = vadd.f32 %v1635, %v1779
      %v1860 = vadd.f32 %v1636, %v1784
      %v1861 = vadd.f32 %v1637, %v1784
      %v1862 = vadd.f32 %v1638, %v1789
      %v1863 = vadd.f32 %v1639, %v1789
      %v1864 = vadd.f32 %v1640, %v1794
      %v1865 = vadd.f32 %v1641, %v1794
      %v1866 = vadd.f32 %v1642, %v1799
      %v1867 = vadd.f32 %v1643, %v1799
      %v1868 = vadd.f32 %v1644, %v1804
      %v1869 = vadd.f32 %v1645, %v1804
      %v1870 = vmax.f32 %v1806, 0.0
      %v1871 = vmax.f32 %v1807, 0.0
      %v1872 = vmax.f32 %v1808, 0.0
      %v1873 = vmax.f32 %v1809, 0.0
      %v1874 = vmax.f32 %v1810, 0.0
      %v1875 = vmax.f32 %v1811, 0.0
      %v1876 = vmax.f32 %v1812, 0.0
      %v1877 = vmax.f32 %v1813, 0.0
      %v1878 = vmax.f32 %v1814, 0.0
      %v1879 = vmax.f32 %v1815, 0.0
      %v1880 = vmax.f32 %v1816, 0.0
      %v1881 = vmax.f32 %v1817, 0.0
      %v1882 = vmax.f32 %v1818, 0.0
      %v1883 = vmax.f32 %v1819, 0.0
      %v1884 = vmax.f32 %v1820, 0.0
      %v1885 = vmax.f32 %v1821, 0.0
      %v1886 = vmax.f32 %v1822, 0.0
      %v1887 = vmax.f32 %v1823, 0.0
      %v1888 = vmax.f32 %v1824, 0.0
      %v1889 = vmax.f32 %v1825, 0.0
      %v1890 = vmax.f32 %v1826, 0.0
      %v1891 = vmax.f32 %v1827, 0.0
      %v1892 = vmax.f32 %v1828, 0.0
      %v1893 = vmax.f32 %v1829, 0.0
      %v1894 = vmax.f32 %v1830, 0.0
      %v1895 = vmax.f32 %v1831, 0.0
      %v1896 = vmax.f32 %v1832, 0.0
      %v1897 = vmax.f32 %v1833, 0.0
      %v1898 = vmax.f32 %v1834, 0.0
      %v1899 = vmax.f32 %v1835, 0.0
      %v1900 = vmax.f32 %v1836, 0.0
      %v1901 = vmax.f32 %v1837, 0.0
      %v1902 = vmax.f32 %v1838, 0.0
      %v1903 = vmax.f32 %v1839, 0.0
      %v1904 = vmax.f32 %v1840, 0.0
      %v1905 = vmax.f32 %v1841, 0.0
      %v1906 = vmax.f32 %v1842, 0.0
      %v1907 = vmax.f32 %v1843, 0.0
      %v1908 = vmax.f32 %v1844, 0.0
      %v1909 = vmax.f32 %v1845, 0.0
      %v1910 = vmax.f32 %v1846, 0.0
      %v1911 = vmax.f32 %v1847, 0.0
      %v1912 = vmax.f32 %v1848, 0.0
      %v1913 = vmax.f32 %v1849, 0.0
      %v1914 = vmax.f32 %v1850, 0.0
      %v1915 = vmax.f32 %v1851, 0.0
      %v1916 = vmax.f32 %v1852, 0.0
      %v1917 = vmax.f32 %v1853, 0.0
      %v1918 = vmax.f32 %v1854, 0.0
      %v1919 = vmax.f32 %v1855, 0.0
      %v1920 = vmax.f32 %v1856, 0.0
      %v1921 = vmax.f32 %v1857, 0.0
      %v1922 = vmax.f32 %v1858, 0.0
      %v1923 = vmax.f32 %v1859, 0.0
      %v1924 = vmax.f32 %v1860, 0.0
      %v1925 = vmax.f32 %v1861, 0.0
      %v1926 = vmax.f32 %v1862, 0.0
      %v1927 = vmax.f32 %v1863, 0.0
      %v1928 = vmax.f32 %v1864, 0.0
      %v1929 = vmax.f32 %v1865, 0.0
      %v1930 = vmax.f32 %v1866, 0.0
      %v1931 = vmax.f32 %v1867, 0.0
      %v1932 = vmax.f32 %v1868, 0.0
      %v1933 = vmax.f32 %v1869, 0.0
      %1936 = vrot.lane.b32.xlu0 %v1331, 16
      %v1937 = vpop.permute.xlu0 %1936
      %1938 = vrot.lane.b32.xlu0 %v1346, 16
      %v1939 = vpop.permute.xlu0 %1938
      %1942 = vrot.lane.b32.xlu0 %v1331, 32
      %v1943 = vpop.permute.xlu0 %1942
      %1944 = vrot.lane.b32.xlu0 %v1346, 32
      %v1945 = vpop.permute.xlu0 %1944
      %1948 = vrot.lane.b32.xlu0 %v1331, 48
      %v1949 = vpop.permute.xlu0 %1948
      %1950 = vrot.lane.b32.xlu0 %v1346, 48
      %v1951 = vpop.permute.xlu0 %1950
      %1954 = vrot.lane.b32.xlu0 %v1331, 64
      %v1955 = vpop.permute.xlu0 %1954
      %1956 = vrot.lane.b32.xlu0 %v1346, 64
      %v1957 = vpop.permute.xlu0 %1956
      %1960 = vrot.lane.b32.xlu0 %v1331, 80
      %v1961 = vpop.permute.xlu0 %1960
      %1962 = vrot.lane.b32.xlu0 %v1346, 80
      %v1963 = vpop.permute.xlu0 %1962
      %1966 = vrot.lane.b32.xlu0 %v1331, 96
      %v1967 = vpop.permute.xlu0 %1966
      %1968 = vrot.lane.b32.xlu0 %v1346, 96
      %v1969 = vpop.permute.xlu0 %1968
      %1972 = vrot.lane.b32.xlu0 %v1331, 112
      %v1973 = vpop.permute.xlu0 %1972
      %1974 = vrot.lane.b32.xlu0 %v1346, 112
      %v1975 = vpop.permute.xlu0 %1974
      %v1978 = vsel %vm957, %v1331, %v1937
      %v1979 = vsel %vm957, %v1346, %v1939
      %v1980 = vsel %vm960, %v1978, %v1943
      %v1981 = vsel %vm960, %v1979, %v1945
      %v1982 = vsel %vm963, %v1980, %v1949
      %v1983 = vsel %vm963, %v1981, %v1951
      %v1984 = vsel %vm966, %v1982, %v1955
      %v1985 = vsel %vm966, %v1983, %v1957
      %v1986 = vsel %vm969, %v1984, %v1961
      %v1987 = vsel %vm969, %v1985, %v1963
      %v1988 = vsel %vm972, %v1986, %v1967
      %v1989 = vsel %vm972, %v1987, %v1969
      %v1990 = vsel %vm975, %v1988, %v1973
      %v1991 = vsel %vm975, %v1989, %v1975
      %v1994 = vrot.slane %v1990, 7
      %v1995 = vrot.slane %v1991, 7
      %v1996 = vsel %vm982, %v1990, %v1994
      %v1997 = vsel %vm984, %v1990, %v1994
      %v1998 = vrot.slane %v1997, 1
      %v1999 = vsel %vm987, %v1990, %v1994
      %v2000 = vrot.slane %v1999, 2
      %v2001 = vsel %vm990, %v1990, %v1994
      %v2002 = vrot.slane %v2001, 3
      %v2003 = vsel %vm993, %v1990, %v1994
      %v2004 = vrot.slane %v2003, 4
      %v2005 = vsel %vm996, %v1990, %v1994
      %v2006 = vrot.slane %v2005, 5
      %v2007 = vsel %vm999, %v1990, %v1994
      %v2008 = vrot.slane %v2007, 6
      %v2009 = vsel %vm1002, %v1994, %v1990
      %v2010 = vrot.slane %v2009, 7
      %v2011 = vsel %vm982, %v1991, %v1995
      %v2012 = vsel %vm984, %v1991, %v1995
      %v2013 = vrot.slane %v2012, 1
      %v2014 = vsel %vm987, %v1991, %v1995
      %v2015 = vrot.slane %v2014, 2
      %v2016 = vsel %vm990, %v1991, %v1995
      %v2017 = vrot.slane %v2016, 3
      %v2018 = vsel %vm993, %v1991, %v1995
      %v2019 = vrot.slane %v2018, 4
      %v2020 = vsel %vm996, %v1991, %v1995
      %v2021 = vrot.slane %v2020, 5
      %v2022 = vsel %vm999, %v1991, %v1995
      %v2023 = vrot.slane %v2022, 6
      %v2024 = vsel %vm1002, %v1995, %v1991
      %v2025 = vrot.slane %v2024, 7
      %v2026 = vperm.slane %v1996, 0
      %v2027 = vperm.slane %v1996, 1
      %v2028 = vperm.slane %v1998, 0
      %v2029 = vperm.slane %v1998, 1
      %v2030 = vperm.slane %v2000, 0
      %v2031 = vperm.slane %v2000, 1
      %v2032 = vperm.slane %v2002, 0
      %v2033 = vperm.slane %v2002, 1
      %v2034 = vperm.slane %v2004, 0
      %v2035 = vperm.slane %v2004, 1
      %v2036 = vperm.slane %v2006, 0
      %v2037 = vperm.slane %v2006, 1
      %v2038 = vperm.slane %v2008, 0
      %v2039 = vperm.slane %v2008, 1
      %v2040 = vperm.slane %v2010, 0
      %v2041 = vperm.slane %v2010, 1
      %v2042 = vperm.slane %v2011, 0
      %v2043 = vperm.slane %v2011, 1
      %v2044 = vperm.slane %v2013, 0
      %v2045 = vperm.slane %v2013, 1
      %v2046 = vperm.slane %v2015, 0
      %v2047 = vperm.slane %v2015, 1
      %v2048 = vperm.slane %v2017, 0
      %v2049 = vperm.slane %v2017, 1
      %v2050 = vperm.slane %v2019, 0
      %v2051 = vperm.slane %v2019, 1
      %v2052 = vperm.slane %v2021, 0
      %v2053 = vperm.slane %v2021, 1
      %v2054 = vperm.slane %v2023, 0
      %v2055 = vperm.slane %v2023, 1
      %v2056 = vperm.slane %v2025, 0
      %v2057 = vperm.slane %v2025, 1
      %v2090 = vmul.f32 %v1870, %v2026
      %v2091 = vmul.f32 %v1871, %v2027
      %v2092 = vmul.f32 %v1872, %v2026
      %v2093 = vmul.f32 %v1873, %v2027
      %v2094 = vmul.f32 %v1874, %v2028
      %v2095 = vmul.f32 %v1875, %v2029
      %v2096 = vmul.f32 %v1876, %v2028
      %v2097 = vmul.f32 %v1877, %v2029
      %v2098 = vmul.f32 %v1878, %v2030
      %v2099 = vmul.f32 %v1879, %v2031
      %v2100 = vmul.f32 %v1880, %v2030
      %v2101 = vmul.f32 %v1881, %v2031
      %v2102 = vmul.f32 %v1882, %v2032
      %v2103 = vmul.f32 %v1883, %v2033
      %v2104 = vmul.f32 %v1884, %v2032
      %v2105 = vmul.f32 %v1885, %v2033
      %v2106 = vmul.f32 %v1886, %v2034
      %v2107 = vmul.f32 %v1887, %v2035
      %v2108 = vmul.f32 %v1888, %v2034
      %v2109 = vmul.f32 %v1889, %v2035
      %v2110 = vmul.f32 %v1890, %v2036
      %v2111 = vmul.f32 %v1891, %v2037
      %v2112 = vmul.f32 %v1892, %v2036
      %v2113 = vmul.f32 %v1893, %v2037
      %v2114 = vmul.f32 %v1894, %v2038
      %v2115 = vmul.f32 %v1895, %v2039
      %v2116 = vmul.f32 %v1896, %v2038
      %v2117 = vmul.f32 %v1897, %v2039
      %v2118 = vmul.f32 %v1898, %v2040
      %v2119 = vmul.f32 %v1899, %v2041
      %v2120 = vmul.f32 %v1900, %v2040
      %v2121 = vmul.f32 %v1901, %v2041
      %v2122 = vmul.f32 %v1902, %v2042
      %v2123 = vmul.f32 %v1903, %v2043
      %v2124 = vmul.f32 %v1904, %v2042
      %v2125 = vmul.f32 %v1905, %v2043
      %v2126 = vmul.f32 %v1906, %v2044
      %v2127 = vmul.f32 %v1907, %v2045
      %v2128 = vmul.f32 %v1908, %v2044
      %v2129 = vmul.f32 %v1909, %v2045
      %v2130 = vmul.f32 %v1910, %v2046
      %v2131 = vmul.f32 %v1911, %v2047
      %v2132 = vmul.f32 %v1912, %v2046
      %v2133 = vmul.f32 %v1913, %v2047
      %v2134 = vmul.f32 %v1914, %v2048
      %v2135 = vmul.f32 %v1915, %v2049
      %v2136 = vmul.f32 %v1916, %v2048
      %v2137 = vmul.f32 %v1917, %v2049
      %v2138 = vmul.f32 %v1918, %v2050
      %v2139 = vmul.f32 %v1919, %v2051
      %v2140 = vmul.f32 %v1920, %v2050
      %v2141 = vmul.f32 %v1921, %v2051
      %v2142 = vmul.f32 %v1922, %v2052
      %v2143 = vmul.f32 %v1923, %v2053
      %v2144 = vmul.f32 %v1924, %v2052
      %v2145 = vmul.f32 %v1925, %v2053
      %v2146 = vmul.f32 %v1926, %v2054
      %v2147 = vmul.f32 %v1927, %v2055
      %v2148 = vmul.f32 %v1928, %v2054
      %v2149 = vmul.f32 %v1929, %v2055
      %v2150 = vmul.f32 %v1930, %v2056
      %v2151 = vmul.f32 %v1931, %v2057
      %v2152 = vmul.f32 %v1932, %v2056
      %v2153 = vmul.f32 %v1933, %v2057
      %v2154 = vadd.f32 %v2090, %v2094
      %v2155 = vadd.f32 %v2154, %v2098
      %v2156 = vadd.f32 %v2155, %v2102
      %v2157 = vadd.f32 %v2156, %v2106
      %v2158 = vadd.f32 %v2157, %v2110
      %v2159 = vadd.f32 %v2158, %v2114
      %v2160 = vadd.f32 %v2159, %v2118
      %v2161 = vadd.f32 %v2160, %v2122
      %v2162 = vadd.f32 %v2161, %v2126
      %v2163 = vadd.f32 %v2162, %v2130
      %v2164 = vadd.f32 %v2163, %v2134
      %v2165 = vadd.f32 %v2164, %v2138
      %v2166 = vadd.f32 %v2165, %v2142
      %v2167 = vadd.f32 %v2166, %v2146
      %v2168 = vadd.f32 %v2167, %v2150
      %v2169 = vadd.f32 %v2091, %v2095
      %v2170 = vadd.f32 %v2169, %v2099
      %v2171 = vadd.f32 %v2170, %v2103
      %v2172 = vadd.f32 %v2171, %v2107
      %v2173 = vadd.f32 %v2172, %v2111
      %v2174 = vadd.f32 %v2173, %v2115
      %v2175 = vadd.f32 %v2174, %v2119
      %v2176 = vadd.f32 %v2175, %v2123
      %v2177 = vadd.f32 %v2176, %v2127
      %v2178 = vadd.f32 %v2177, %v2131
      %v2179 = vadd.f32 %v2178, %v2135
      %v2180 = vadd.f32 %v2179, %v2139
      %v2181 = vadd.f32 %v2180, %v2143
      %v2182 = vadd.f32 %v2181, %v2147
      %v2183 = vadd.f32 %v2182, %v2151
      %v2184 = vadd.f32 %v2092, %v2096
      %v2185 = vadd.f32 %v2184, %v2100
      %v2186 = vadd.f32 %v2185, %v2104
      %v2187 = vadd.f32 %v2186, %v2108
      %v2188 = vadd.f32 %v2187, %v2112
      %v2189 = vadd.f32 %v2188, %v2116
      %v2190 = vadd.f32 %v2189, %v2120
      %v2191 = vadd.f32 %v2190, %v2124
      %v2192 = vadd.f32 %v2191, %v2128
      %v2193 = vadd.f32 %v2192, %v2132
      %v2194 = vadd.f32 %v2193, %v2136
      %v2195 = vadd.f32 %v2194, %v2140
      %v2196 = vadd.f32 %v2195, %v2144
      %v2197 = vadd.f32 %v2196, %v2148
      %v2198 = vadd.f32 %v2197, %v2152
      %v2199 = vadd.f32 %v2093, %v2097
      %v2200 = vadd.f32 %v2199, %v2101
      %v2201 = vadd.f32 %v2200, %v2105
      %v2202 = vadd.f32 %v2201, %v2109
      %v2203 = vadd.f32 %v2202, %v2113
      %v2204 = vadd.f32 %v2203, %v2117
      %v2205 = vadd.f32 %v2204, %v2121
      %v2206 = vadd.f32 %v2205, %v2125
      %v2207 = vadd.f32 %v2206, %v2129
      %v2208 = vadd.f32 %v2207, %v2133
      %v2209 = vadd.f32 %v2208, %v2137
      %v2210 = vadd.f32 %v2209, %v2141
      %v2211 = vadd.f32 %v2210, %v2145
      %v2212 = vadd.f32 %v2211, %v2149
      %v2213 = vadd.f32 %v2212, %v2153
      %2214 = vmatpush.msra.mxu0 %v305
      %2215 = vmatpush.msra.mxu0 %v304
      %2216 = vmatpush.msra.mxu0 %v303
      %2217 = vmatpush.msra.mxu0 %v302
      %2218 = vmatpush.msra.mxu0 %v301
      %2219 = vmatpush.msra.mxu0 %v300
      %2220 = vmatpush.msra.mxu0 %v299
      %2221 = vmatpush.msra.mxu0 %v298
      %2222 = vmatpush.msra.mxu0 %v297
      %2223 = vmatpush.msra.mxu0 %v296
      %2224 = vmatpush.msra.mxu0 %v295
      %2225 = vmatpush.msra.mxu0 %v294
      %2226 = vmatpush.msra.mxu0 %v293
      %2227 = vmatpush.msra.mxu0 %v292
      %2228 = vmatpush.msra.mxu0 %v291
      %2229 = vmatpush.msra.mxu0 %v290
      %2230 = vmatmul.f32.gmra.mxu0 %v2168
      %v2231 = vpop.f32.mrf.mxu0
      %v2232 = vadd.f32 0.0, %v2231
      %2233 = vmatmul.f32.gmra.mxu0 %v2198
      %v2234 = vpop.f32.mrf.mxu0
      %v2235 = vadd.f32 0.0, %v2234
      %2236 = vdwg.mxu0
      %2237 = vmatpush.msra.mxu0 %v321
      %2238 = vmatpush.msra.mxu0 %v320
      %2239 = vmatpush.msra.mxu0 %v319
      %2240 = vmatpush.msra.mxu0 %v318
      %2241 = vmatpush.msra.mxu0 %v317
      %2242 = vmatpush.msra.mxu0 %v316
      %2243 = vmatpush.msra.mxu0 %v315
      %2244 = vmatpush.msra.mxu0 %v314
      %2245 = vmatpush.msra.mxu0 %v313
      %2246 = vmatpush.msra.mxu0 %v312
      %2247 = vmatpush.msra.mxu0 %v311
      %2248 = vmatpush.msra.mxu0 %v310
      %2249 = vmatpush.msra.mxu0 %v309
      %2250 = vmatpush.msra.mxu0 %v308
      %2251 = vmatpush.msra.mxu0 %v307
      %2252 = vmatpush.msra.mxu0 %v306
      %2253 = vmatmul.f32.gmra.mxu0 %v2183
      %v2254 = vpop.f32.mrf.mxu0
      %v2255 = vadd.f32 %v2232, %v2254
      %2256 = vmatmul.f32.gmra.mxu0 %v2213
      %v2257 = vpop.f32.mrf.mxu0
      %v2258 = vadd.f32 %v2235, %v2257
      %2259 = vdwg.mxu0
      %v2261 = vsel %vm957, %v1414, 0
      %v2264 = vsel %vm957, %v1415, 0
      %2266 = vmatpush.msra.mxu0 0.0
      %2267 = vmatpush.msra.mxu0 0.0
      %2268 = vmatpush.msra.mxu0 0.0
      %2269 = vmatpush.msra.mxu0 0.0
      %2270 = vmatpush.msra.mxu0 0.0
      %2271 = vmatpush.msra.mxu0 0.0
      %2272 = vmatpush.msra.mxu0 0.0
      %2273 = vmatpush.msra.mxu0 0.0
      %2274 = vmatpush.msra.mxu0 0.0
      %2275 = vmatpush.msra.mxu0 0.0
      %2276 = vmatpush.msra.mxu0 0.0
      %2277 = vmatpush.msra.mxu0 0.0
      %2278 = vmatpush.msra.mxu0 0.0
      %2279 = vmatpush.msra.mxu0 0.0
      %2280 = vmatpush.msra.mxu0 %v1346
      %2281 = vmatpush.msra.mxu0 %v1331
      %2282 = vmatmul.f32.gmra.mxu0 %v2261
      %v2283 = vpop.f32.mrf.mxu0
      %v2284 = vadd.f32 0.0, %v2283
      %2285 = vmatmul.f32.gmra.mxu0 %v2264
      %v2286 = vpop.f32.mrf.mxu0
      %v2287 = vadd.f32 0.0, %v2286
      %2288 = vdwg.mxu0
      %2290 = vset.pattern.permute.xlu0 0
      %2291 = vperm.xlu0 %2290, %v1417
      %v2292 = vpop.permute.xlu0 %2291
      %2295 = vset.pattern.permute.xlu0 0
      %2296 = vperm.xlu0 %2295, %v1418
      %v2297 = vpop.permute.xlu0 %2296
      %v2299 = vmul.f32 %v2255, %v2292
      %v2300 = vmul.f32 %v2258, %v2297
      %v2301 = vadd.f32 %v2299, %v2284
      %v2302 = vadd.f32 %v2300, %v2287
      %2304 = vset.pattern.permute.xlu0 0
      %2305 = vperm.xlu0 %2304, %v1420
      %v2306 = vpop.permute.xlu0 %2305
      %2309 = vset.pattern.permute.xlu0 0
      %2310 = vperm.xlu0 %2309, %v1421
      %v2311 = vpop.permute.xlu0 %2310
      %v2313 = vadd.f32 %v2301, %v2306
      %v2314 = vadd.f32 %v2302, %v2311
      %v2315 = vxor.u32 %v2313, 2147483648
      %v2316 = vxor.u32 %v2314, 2147483648
      %v2317 = vmul.f32 %v2315, 1.442695
      %v2318 = vpow.pop %v2317
      %v2319 = vmul.f32 %v2316, 1.442695
      %v2320 = vpow.pop %v2319
      %v2321 = vadd.f32 %v2318, 1.0
      %v2322 = vadd.f32 %v2320, 1.0
      %v2323 = vrcp.pop %v2321
      %v2324 = vmul.f32 %v2321, %v2323
      %v2325 = vsub.f32 1.0, %v2324
      %v2326 = vmul.f32 %v2323, %v2325
      %v2327 = vadd.f32 %v2323, %v2326
      %vm2328 = vweird.f32 %v2321
      %vm2329 = vweird.f32 %v2323
      %vm2330 = vmor %vm2328, %vm2329
      %v2331 = vsel %vm2330, %v2323, %v2327
      %v2332 = vand.u32 2147483647, %v2321
      %vm2333 = vcmp.eq.f32.partialorder %v2332, 8.507059e+37
      %v2334 = vand.u32 %v2321, 2147483648
      %v2335 = vor.u32 1.1754944e-38, %v2334
      %v2336 = vsel %vm2333, %v2335, %v2331
      %v2337 = vmul.f32 1.0, %v2336
      %v2338 = vrcp.pop %v2322
      %v2339 = vmul.f32 %v2322, %v2338
      %v2340 = vsub.f32 1.0, %v2339
      %v2341 = vmul.f32 %v2338, %v2340
      %v2342 = vadd.f32 %v2338, %v2341
      %vm2343 = vweird.f32 %v2322
      %vm2344 = vweird.f32 %v2338
      %vm2345 = vmor %vm2343, %vm2344
      %v2346 = vsel %vm2345, %v2338, %v2342
      %v2347 = vand.u32 2147483647, %v2322
      %vm2348 = vcmp.eq.f32.partialorder %v2347, 8.507059e+37
      %v2349 = vand.u32 %v2322, 2147483648
      %v2350 = vor.u32 1.1754944e-38, %v2349
      %v2351 = vsel %vm2348, %v2350, %v2346
      %v2352 = vmul.f32 1.0, %v2351
      %s2353 = scalar_lea.vmem %s3, 1024
      %v2354 = vld [vmem:[%s2353] sm:$0xff]
      %v2355 = vld [vmem:[%s2353 + $0x8] sm:$0xff]
      %v2356 = vld [vmem:[%s2353 + $0x10] sm:$0xff]
      %v2357 = vld [vmem:[%s2353 + $0x18] sm:$0xff]
      %v2358 = vld [vmem:[%s2353 + $0x20] sm:$0xff]
      %v2359 = vld [vmem:[%s2353 + $0x28] sm:$0xff]
      %v2360 = vld [vmem:[%s2353 + $0x30] sm:$0xff]
      %v2361 = vld [vmem:[%s2353 + $0x38] sm:$0xff]
      %v2362 = vld [vmem:[%s2353 + $0x40] sm:$0xff]
      %v2363 = vld [vmem:[%s2353 + $0x48] sm:$0xff]
      %v2364 = vld [vmem:[%s2353 + $0x50] sm:$0xff]
      %v2365 = vld [vmem:[%s2353 + $0x58] sm:$0xff]
      %v2366 = vld [vmem:[%s2353 + $0x60] sm:$0xff]
      %v2367 = vld [vmem:[%s2353 + $0x68] sm:$0xff]
      %v2368 = vld [vmem:[%s2353 + $0x70] sm:$0xff]
      %v2369 = vld [vmem:[%s2353 + $0x78] sm:$0xff]
      %v2370 = vld [vmem:[%s2353 + $0x80] sm:$0xff]
      %v2371 = vld [vmem:[%s2353 + $0x88] sm:$0xff]
      %v2372 = vld [vmem:[%s2353 + $0x90] sm:$0xff]
      %v2373 = vld [vmem:[%s2353 + $0x98] sm:$0xff]
      %v2374 = vld [vmem:[%s2353 + $0xa0] sm:$0xff]
      %v2375 = vld [vmem:[%s2353 + $0xa8] sm:$0xff]
      %v2376 = vld [vmem:[%s2353 + $0xb0] sm:$0xff]
      %v2377 = vld [vmem:[%s2353 + $0xb8] sm:$0xff]
      %v2378 = vld [vmem:[%s2353 + $0xc0] sm:$0xff]
      %v2379 = vld [vmem:[%s2353 + $0xc8] sm:$0xff]
      %v2380 = vld [vmem:[%s2353 + $0xd0] sm:$0xff]
      %v2381 = vld [vmem:[%s2353 + $0xd8] sm:$0xff]
      %v2382 = vld [vmem:[%s2353 + $0xe0] sm:$0xff]
      %v2383 = vld [vmem:[%s2353 + $0xe8] sm:$0xff]
      %v2384 = vld [vmem:[%s2353 + $0xf0] sm:$0xff]
      %v2385 = vld [vmem:[%s2353 + $0xf8] sm:$0xff]
      %s2386 = scalar_lea.vmem %s3, 1280
      %v2387 = vld [vmem:[%s2386] sm:$0xff]
      %v2388 = vld [vmem:[%s2386 + $0x8] sm:$0xff]
      %v2389 = vld [vmem:[%s2386 + $0x10] sm:$0xff]
      %v2390 = vld [vmem:[%s2386 + $0x18] sm:$0xff]
      %v2391 = vld [vmem:[%s2386 + $0x20] sm:$0xff]
      %v2392 = vld [vmem:[%s2386 + $0x28] sm:$0xff]
      %v2393 = vld [vmem:[%s2386 + $0x30] sm:$0xff]
      %v2394 = vld [vmem:[%s2386 + $0x38] sm:$0xff]
      %v2395 = vld [vmem:[%s2386 + $0x40] sm:$0xff]
      %v2396 = vld [vmem:[%s2386 + $0x48] sm:$0xff]
      %v2397 = vld [vmem:[%s2386 + $0x50] sm:$0xff]
      %v2398 = vld [vmem:[%s2386 + $0x58] sm:$0xff]
      %v2399 = vld [vmem:[%s2386 + $0x60] sm:$0xff]
      %v2400 = vld [vmem:[%s2386 + $0x68] sm:$0xff]
      %v2401 = vld [vmem:[%s2386 + $0x70] sm:$0xff]
      %v2402 = vld [vmem:[%s2386 + $0x78] sm:$0xff]
      %v2403 = vld [vmem:[%s2386 + $0x80] sm:$0xff]
      %v2404 = vld [vmem:[%s2386 + $0x88] sm:$0xff]
      %v2405 = vld [vmem:[%s2386 + $0x90] sm:$0xff]
      %v2406 = vld [vmem:[%s2386 + $0x98] sm:$0xff]
      %v2407 = vld [vmem:[%s2386 + $0xa0] sm:$0xff]
      %v2408 = vld [vmem:[%s2386 + $0xa8] sm:$0xff]
      %v2409 = vld [vmem:[%s2386 + $0xb0] sm:$0xff]
      %v2410 = vld [vmem:[%s2386 + $0xb8] sm:$0xff]
      %v2411 = vld [vmem:[%s2386 + $0xc0] sm:$0xff]
      %v2412 = vld [vmem:[%s2386 + $0xc8] sm:$0xff]
      %v2413 = vld [vmem:[%s2386 + $0xd0] sm:$0xff]
      %v2414 = vld [vmem:[%s2386 + $0xd8] sm:$0xff]
      %v2415 = vld [vmem:[%s2386 + $0xe0] sm:$0xff]
      %v2416 = vld [vmem:[%s2386 + $0xe8] sm:$0xff]
      %v2417 = vld [vmem:[%s2386 + $0xf0] sm:$0xff]
      %v2418 = vld [vmem:[%s2386 + $0xf8] sm:$0xff]
      %s2419 = scalar_lea.vmem %s4, 32
      %v2420 = vld [vmem:[%s2419] sm:$0xff]
      %v2421 = vld [vmem:[%s2419 + $0x8] sm:$0xff]
      %s2422 = scalar_lea.vmem %s5, 64
      %v2423 = vld [vmem:[%s2422] sm:$0xff]
      %v2424 = vld [vmem:[%s2422 + $0x8] sm:$0xff]
      %s2425 = scalar_lea.vmem %s5, 80
      %v2426 = vld [vmem:[%s2425] sm:$0xff]
      %v2427 = vld [vmem:[%s2425 + $0x8] sm:$0xff]
      %2429 = vset.pattern.permute.xlu0 0
      %2430 = vperm.xlu0 %2429, %v2354
      %v2431 = vpop.permute.xlu0 %2430
      %2434 = vset.pattern.permute.xlu0 0
      %2435 = vperm.xlu0 %2434, %v2355
      %v2436 = vpop.permute.xlu0 %2435
      %2439 = vset.pattern.permute.xlu0 0
      %2440 = vperm.xlu0 %2439, %v2356
      %v2441 = vpop.permute.xlu0 %2440
      %2444 = vset.pattern.permute.xlu0 0
      %2445 = vperm.xlu0 %2444, %v2357
      %v2446 = vpop.permute.xlu0 %2445
      %2449 = vset.pattern.permute.xlu0 0
      %2450 = vperm.xlu0 %2449, %v2358
      %v2451 = vpop.permute.xlu0 %2450
      %2454 = vset.pattern.permute.xlu0 0
      %2455 = vperm.xlu0 %2454, %v2359
      %v2456 = vpop.permute.xlu0 %2455
      %2459 = vset.pattern.permute.xlu0 0
      %2460 = vperm.xlu0 %2459, %v2360
      %v2461 = vpop.permute.xlu0 %2460
      %2464 = vset.pattern.permute.xlu0 0
      %2465 = vperm.xlu0 %2464, %v2361
      %v2466 = vpop.permute.xlu0 %2465
      %2469 = vset.pattern.permute.xlu0 0
      %2470 = vperm.xlu0 %2469, %v2362
      %v2471 = vpop.permute.xlu0 %2470
      %2474 = vset.pattern.permute.xlu0 0
      %2475 = vperm.xlu0 %2474, %v2363
      %v2476 = vpop.permute.xlu0 %2475
      %2479 = vset.pattern.permute.xlu0 0
      %2480 = vperm.xlu0 %2479, %v2364
      %v2481 = vpop.permute.xlu0 %2480
      %2484 = vset.pattern.permute.xlu0 0
      %2485 = vperm.xlu0 %2484, %v2365
      %v2486 = vpop.permute.xlu0 %2485
      %2489 = vset.pattern.permute.xlu0 0
      %2490 = vperm.xlu0 %2489, %v2366
      %v2491 = vpop.permute.xlu0 %2490
      %2494 = vset.pattern.permute.xlu0 0
      %2495 = vperm.xlu0 %2494, %v2367
      %v2496 = vpop.permute.xlu0 %2495
      %2499 = vset.pattern.permute.xlu0 0
      %2500 = vperm.xlu0 %2499, %v2368
      %v2501 = vpop.permute.xlu0 %2500
      %2504 = vset.pattern.permute.xlu0 0
      %2505 = vperm.xlu0 %2504, %v2369
      %v2506 = vpop.permute.xlu0 %2505
      %2509 = vset.pattern.permute.xlu0 0
      %2510 = vperm.xlu0 %2509, %v2370
      %v2511 = vpop.permute.xlu0 %2510
      %2514 = vset.pattern.permute.xlu0 0
      %2515 = vperm.xlu0 %2514, %v2371
      %v2516 = vpop.permute.xlu0 %2515
      %2519 = vset.pattern.permute.xlu0 0
      %2520 = vperm.xlu0 %2519, %v2372
      %v2521 = vpop.permute.xlu0 %2520
      %2524 = vset.pattern.permute.xlu0 0
      %2525 = vperm.xlu0 %2524, %v2373
      %v2526 = vpop.permute.xlu0 %2525
      %2529 = vset.pattern.permute.xlu0 0
      %2530 = vperm.xlu0 %2529, %v2374
      %v2531 = vpop.permute.xlu0 %2530
      %2534 = vset.pattern.permute.xlu0 0
      %2535 = vperm.xlu0 %2534, %v2375
      %v2536 = vpop.permute.xlu0 %2535
      %2539 = vset.pattern.permute.xlu0 0
      %2540 = vperm.xlu0 %2539, %v2376
      %v2541 = vpop.permute.xlu0 %2540
      %2544 = vset.pattern.permute.xlu0 0
      %2545 = vperm.xlu0 %2544, %v2377
      %v2546 = vpop.permute.xlu0 %2545
      %2549 = vset.pattern.permute.xlu0 0
      %2550 = vperm.xlu0 %2549, %v2378
      %v2551 = vpop.permute.xlu0 %2550
      %2554 = vset.pattern.permute.xlu0 0
      %2555 = vperm.xlu0 %2554, %v2379
      %v2556 = vpop.permute.xlu0 %2555
      %2559 = vset.pattern.permute.xlu0 0
      %2560 = vperm.xlu0 %2559, %v2380
      %v2561 = vpop.permute.xlu0 %2560
      %2564 = vset.pattern.permute.xlu0 0
      %2565 = vperm.xlu0 %2564, %v2381
      %v2566 = vpop.permute.xlu0 %2565
      %2569 = vset.pattern.permute.xlu0 0
      %2570 = vperm.xlu0 %2569, %v2382
      %v2571 = vpop.permute.xlu0 %2570
      %2574 = vset.pattern.permute.xlu0 0
      %2575 = vperm.xlu0 %2574, %v2383
      %v2576 = vpop.permute.xlu0 %2575
      %2579 = vset.pattern.permute.xlu0 0
      %2580 = vperm.xlu0 %2579, %v2384
      %v2581 = vpop.permute.xlu0 %2580
      %2584 = vset.pattern.permute.xlu0 0
      %2585 = vperm.xlu0 %2584, %v2385
      %v2586 = vpop.permute.xlu0 %2585
      %v2588 = vmul.f32 %v397, %v2431
      %v2589 = vmul.f32 %v398, %v2431
      %v2590 = vmul.f32 %v397, %v2436
      %v2591 = vmul.f32 %v398, %v2436
      %v2592 = vmul.f32 %v397, %v2441
      %v2593 = vmul.f32 %v398, %v2441
      %v2594 = vmul.f32 %v397, %v2446
      %v2595 = vmul.f32 %v398, %v2446
      %v2596 = vmul.f32 %v397, %v2451
      %v2597 = vmul.f32 %v398, %v2451
      %v2598 = vmul.f32 %v397, %v2456
      %v2599 = vmul.f32 %v398, %v2456
      %v2600 = vmul.f32 %v397, %v2461
      %v2601 = vmul.f32 %v398, %v2461
      %v2602 = vmul.f32 %v397, %v2466
      %v2603 = vmul.f32 %v398, %v2466
      %v2604 = vmul.f32 %v397, %v2471
      %v2605 = vmul.f32 %v398, %v2471
      %v2606 = vmul.f32 %v397, %v2476
      %v2607 = vmul.f32 %v398, %v2476
      %v2608 = vmul.f32 %v397, %v2481
      %v2609 = vmul.f32 %v398, %v2481
      %v2610 = vmul.f32 %v397, %v2486
      %v2611 = vmul.f32 %v398, %v2486
      %v2612 = vmul.f32 %v397, %v2491
      %v2613 = vmul.f32 %v398, %v2491
      %v2614 = vmul.f32 %v397, %v2496
      %v2615 = vmul.f32 %v398, %v2496
      %v2616 = vmul.f32 %v397, %v2501
      %v2617 = vmul.f32 %v398, %v2501
      %v2618 = vmul.f32 %v397, %v2506
      %v2619 = vmul.f32 %v398, %v2506
      %v2620 = vmul.f32 %v397, %v2511
      %v2621 = vmul.f32 %v398, %v2511
      %v2622 = vmul.f32 %v397, %v2516
      %v2623 = vmul.f32 %v398, %v2516
      %v2624 = vmul.f32 %v397, %v2521
      %v2625 = vmul.f32 %v398, %v2521
      %v2626 = vmul.f32 %v397, %v2526
      %v2627 = vmul.f32 %v398, %v2526
      %v2628 = vmul.f32 %v397, %v2531
      %v2629 = vmul.f32 %v398, %v2531
      %v2630 = vmul.f32 %v397, %v2536
      %v2631 = vmul.f32 %v398, %v2536
      %v2632 = vmul.f32 %v397, %v2541
      %v2633 = vmul.f32 %v398, %v2541
      %v2634 = vmul.f32 %v397, %v2546
      %v2635 = vmul.f32 %v398, %v2546
      %v2636 = vmul.f32 %v397, %v2551
      %v2637 = vmul.f32 %v398, %v2551
      %v2638 = vmul.f32 %v397, %v2556
      %v2639 = vmul.f32 %v398, %v2556
      %v2640 = vmul.f32 %v397, %v2561
      %v2641 = vmul.f32 %v398, %v2561
      %v2642 = vmul.f32 %v397, %v2566
      %v2643 = vmul.f32 %v398, %v2566
      %v2644 = vmul.f32 %v397, %v2571
      %v2645 = vmul.f32 %v398, %v2571
      %v2646 = vmul.f32 %v397, %v2576
      %v2647 = vmul.f32 %v398, %v2576
      %v2648 = vmul.f32 %v397, %v2581
      %v2649 = vmul.f32 %v398, %v2581
      %v2650 = vmul.f32 %v397, %v2586
      %v2651 = vmul.f32 %v398, %v2586
      %2653 = vset.pattern.permute.xlu0 0
      %2654 = vperm.xlu0 %2653, %v2387
      %v2655 = vpop.permute.xlu0 %2654
      %2658 = vset.pattern.permute.xlu0 0
      %2659 = vperm.xlu0 %2658, %v2388
      %v2660 = vpop.permute.xlu0 %2659
      %2663 = vset.pattern.permute.xlu0 0
      %2664 = vperm.xlu0 %2663, %v2389
      %v2665 = vpop.permute.xlu0 %2664
      %2668 = vset.pattern.permute.xlu0 0
      %2669 = vperm.xlu0 %2668, %v2390
      %v2670 = vpop.permute.xlu0 %2669
      %2673 = vset.pattern.permute.xlu0 0
      %2674 = vperm.xlu0 %2673, %v2391
      %v2675 = vpop.permute.xlu0 %2674
      %2678 = vset.pattern.permute.xlu0 0
      %2679 = vperm.xlu0 %2678, %v2392
      %v2680 = vpop.permute.xlu0 %2679
      %2683 = vset.pattern.permute.xlu0 0
      %2684 = vperm.xlu0 %2683, %v2393
      %v2685 = vpop.permute.xlu0 %2684
      %2688 = vset.pattern.permute.xlu0 0
      %2689 = vperm.xlu0 %2688, %v2394
      %v2690 = vpop.permute.xlu0 %2689
      %2693 = vset.pattern.permute.xlu0 0
      %2694 = vperm.xlu0 %2693, %v2395
      %v2695 = vpop.permute.xlu0 %2694
      %2698 = vset.pattern.permute.xlu0 0
      %2699 = vperm.xlu0 %2698, %v2396
      %v2700 = vpop.permute.xlu0 %2699
      %2703 = vset.pattern.permute.xlu0 0
      %2704 = vperm.xlu0 %2703, %v2397
      %v2705 = vpop.permute.xlu0 %2704
      %2708 = vset.pattern.permute.xlu0 0
      %2709 = vperm.xlu0 %2708, %v2398
      %v2710 = vpop.permute.xlu0 %2709
      %2713 = vset.pattern.permute.xlu0 0
      %2714 = vperm.xlu0 %2713, %v2399
      %v2715 = vpop.permute.xlu0 %2714
      %2718 = vset.pattern.permute.xlu0 0
      %2719 = vperm.xlu0 %2718, %v2400
      %v2720 = vpop.permute.xlu0 %2719
      %2723 = vset.pattern.permute.xlu0 0
      %2724 = vperm.xlu0 %2723, %v2401
      %v2725 = vpop.permute.xlu0 %2724
      %2728 = vset.pattern.permute.xlu0 0
      %2729 = vperm.xlu0 %2728, %v2402
      %v2730 = vpop.permute.xlu0 %2729
      %2733 = vset.pattern.permute.xlu0 0
      %2734 = vperm.xlu0 %2733, %v2403
      %v2735 = vpop.permute.xlu0 %2734
      %2738 = vset.pattern.permute.xlu0 0
      %2739 = vperm.xlu0 %2738, %v2404
      %v2740 = vpop.permute.xlu0 %2739
      %2743 = vset.pattern.permute.xlu0 0
      %2744 = vperm.xlu0 %2743, %v2405
      %v2745 = vpop.permute.xlu0 %2744
      %2748 = vset.pattern.permute.xlu0 0
      %2749 = vperm.xlu0 %2748, %v2406
      %v2750 = vpop.permute.xlu0 %2749
      %2753 = vset.pattern.permute.xlu0 0
      %2754 = vperm.xlu0 %2753, %v2407
      %v2755 = vpop.permute.xlu0 %2754
      %2758 = vset.pattern.permute.xlu0 0
      %2759 = vperm.xlu0 %2758, %v2408
      %v2760 = vpop.permute.xlu0 %2759
      %2763 = vset.pattern.permute.xlu0 0
      %2764 = vperm.xlu0 %2763, %v2409
      %v2765 = vpop.permute.xlu0 %2764
      %2768 = vset.pattern.permute.xlu0 0
      %2769 = vperm.xlu0 %2768, %v2410
      %v2770 = vpop.permute.xlu0 %2769
      %2773 = vset.pattern.permute.xlu0 0
      %2774 = vperm.xlu0 %2773, %v2411
      %v2775 = vpop.permute.xlu0 %2774
      %2778 = vset.pattern.permute.xlu0 0
      %2779 = vperm.xlu0 %2778, %v2412
      %v2780 = vpop.permute.xlu0 %2779
      %2783 = vset.pattern.permute.xlu0 0
      %2784 = vperm.xlu0 %2783, %v2413
      %v2785 = vpop.permute.xlu0 %2784
      %2788 = vset.pattern.permute.xlu0 0
      %2789 = vperm.xlu0 %2788, %v2414
      %v2790 = vpop.permute.xlu0 %2789
      %2793 = vset.pattern.permute.xlu0 0
      %2794 = vperm.xlu0 %2793, %v2415
      %v2795 = vpop.permute.xlu0 %2794
      %2798 = vset.pattern.permute.xlu0 0
      %2799 = vperm.xlu0 %2798, %v2416
      %v2800 = vpop.permute.xlu0 %2799
      %2803 = vset.pattern.permute.xlu0 0
      %2804 = vperm.xlu0 %2803, %v2417
      %v2805 = vpop.permute.xlu0 %2804
      %2808 = vset.pattern.permute.xlu0 0
      %2809 = vperm.xlu0 %2808, %v2418
      %v2810 = vpop.permute.xlu0 %2809
      %v2812 = vadd.f32 %v2588, %v2655
      %v2813 = vadd.f32 %v2589, %v2655
      %v2814 = vadd.f32 %v2590, %v2660
      %v2815 = vadd.f32 %v2591, %v2660
      %v2816 = vadd.f32 %v2592, %v2665
      %v2817 = vadd.f32 %v2593, %v2665
      %v2818 = vadd.f32 %v2594, %v2670
      %v2819 = vadd.f32 %v2595, %v2670
      %v2820 = vadd.f32 %v2596, %v2675
      %v2821 = vadd.f32 %v2597, %v2675
      %v2822 = vadd.f32 %v2598, %v2680
      %v2823 = vadd.f32 %v2599, %v2680
      %v2824 = vadd.f32 %v2600, %v2685
      %v2825 = vadd.f32 %v2601, %v2685
      %v2826 = vadd.f32 %v2602, %v2690
      %v2827 = vadd.f32 %v2603, %v2690
      %v2828 = vadd.f32 %v2604, %v2695
      %v2829 = vadd.f32 %v2605, %v2695
      %v2830 = vadd.f32 %v2606, %v2700
      %v2831 = vadd.f32 %v2607, %v2700
      %v2832 = vadd.f32 %v2608, %v2705
      %v2833 = vadd.f32 %v2609, %v2705
      %v2834 = vadd.f32 %v2610, %v2710
      %v2835 = vadd.f32 %v2611, %v2710
      %v2836 = vadd.f32 %v2612, %v2715
      %v2837 = vadd.f32 %v2613, %v2715
      %v2838 = vadd.f32 %v2614, %v2720
      %v2839 = vadd.f32 %v2615, %v2720
      %v2840 = vadd.f32 %v2616, %v2725
      %v2841 = vadd.f32 %v2617, %v2725
      %v2842 = vadd.f32 %v2618, %v2730
      %v2843 = vadd.f32 %v2619, %v2730
      %v2844 = vadd.f32 %v2620, %v2735
      %v2845 = vadd.f32 %v2621, %v2735
      %v2846 = vadd.f32 %v2622, %v2740
      %v2847 = vadd.f32 %v2623, %v2740
      %v2848 = vadd.f32 %v2624, %v2745
      %v2849 = vadd.f32 %v2625, %v2745
      %v2850 = vadd.f32 %v2626, %v2750
      %v2851 = vadd.f32 %v2627, %v2750
      %v2852 = vadd.f32 %v2628, %v2755
      %v2853 = vadd.f32 %v2629, %v2755
      %v2854 = vadd.f32 %v2630, %v2760
      %v2855 = vadd.f32 %v2631, %v2760
      %v2856 = vadd.f32 %v2632, %v2765
      %v2857 = vadd.f32 %v2633, %v2765
      %v2858 = vadd.f32 %v2634, %v2770
      %v2859 = vadd.f32 %v2635, %v2770
      %v2860 = vadd.f32 %v2636, %v2775
      %v2861 = vadd.f32 %v2637, %v2775
      %v2862 = vadd.f32 %v2638, %v2780
      %v2863 = vadd.f32 %v2639, %v2780
      %v2864 = vadd.f32 %v2640, %v2785
      %v2865 = vadd.f32 %v2641, %v2785
      %v2866 = vadd.f32 %v2642, %v2790
      %v2867 = vadd.f32 %v2643, %v2790
      %v2868 = vadd.f32 %v2644, %v2795
      %v2869 = vadd.f32 %v2645, %v2795
      %v2870 = vadd.f32 %v2646, %v2800
      %v2871 = vadd.f32 %v2647, %v2800
      %v2872 = vadd.f32 %v2648, %v2805
      %v2873 = vadd.f32 %v2649, %v2805
      %v2874 = vadd.f32 %v2650, %v2810
      %v2875 = vadd.f32 %v2651, %v2810
      %v2876 = vmax.f32 %v2812, 0.0
      %v2877 = vmax.f32 %v2813, 0.0
      %v2878 = vmax.f32 %v2814, 0.0
      %v2879 = vmax.f32 %v2815, 0.0
      %v2880 = vmax.f32 %v2816, 0.0
      %v2881 = vmax.f32 %v2817, 0.0
      %v2882 = vmax.f32 %v2818, 0.0
      %v2883 = vmax.f32 %v2819, 0.0
      %v2884 = vmax.f32 %v2820, 0.0
      %v2885 = vmax.f32 %v2821, 0.0
      %v2886 = vmax.f32 %v2822, 0.0
      %v2887 = vmax.f32 %v2823, 0.0
      %v2888 = vmax.f32 %v2824, 0.0
      %v2889 = vmax.f32 %v2825, 0.0
      %v2890 = vmax.f32 %v2826, 0.0
      %v2891 = vmax.f32 %v2827, 0.0
      %v2892 = vmax.f32 %v2828, 0.0
      %v2893 = vmax.f32 %v2829, 0.0
      %v2894 = vmax.f32 %v2830, 0.0
      %v2895 = vmax.f32 %v2831, 0.0
      %v2896 = vmax.f32 %v2832, 0.0
      %v2897 = vmax.f32 %v2833, 0.0
      %v2898 = vmax.f32 %v2834, 0.0
      %v2899 = vmax.f32 %v2835, 0.0
      %v2900 = vmax.f32 %v2836, 0.0
      %v2901 = vmax.f32 %v2837, 0.0
      %v2902 = vmax.f32 %v2838, 0.0
      %v2903 = vmax.f32 %v2839, 0.0
      %v2904 = vmax.f32 %v2840, 0.0
      %v2905 = vmax.f32 %v2841, 0.0
      %v2906 = vmax.f32 %v2842, 0.0
      %v2907 = vmax.f32 %v2843, 0.0
      %v2908 = vmax.f32 %v2844, 0.0
      %v2909 = vmax.f32 %v2845, 0.0
      %v2910 = vmax.f32 %v2846, 0.0
      %v2911 = vmax.f32 %v2847, 0.0
      %v2912 = vmax.f32 %v2848, 0.0
      %v2913 = vmax.f32 %v2849, 0.0
      %v2914 = vmax.f32 %v2850, 0.0
      %v2915 = vmax.f32 %v2851, 0.0
      %v2916 = vmax.f32 %v2852, 0.0
      %v2917 = vmax.f32 %v2853, 0.0
      %v2918 = vmax.f32 %v2854, 0.0
      %v2919 = vmax.f32 %v2855, 0.0
      %v2920 = vmax.f32 %v2856, 0.0
      %v2921 = vmax.f32 %v2857, 0.0
      %v2922 = vmax.f32 %v2858, 0.0
      %v2923 = vmax.f32 %v2859, 0.0
      %v2924 = vmax.f32 %v2860, 0.0
      %v2925 = vmax.f32 %v2861, 0.0
      %v2926 = vmax.f32 %v2862, 0.0
      %v2927 = vmax.f32 %v2863, 0.0
      %v2928 = vmax.f32 %v2864, 0.0
      %v2929 = vmax.f32 %v2865, 0.0
      %v2930 = vmax.f32 %v2866, 0.0
      %v2931 = vmax.f32 %v2867, 0.0
      %v2932 = vmax.f32 %v2868, 0.0
      %v2933 = vmax.f32 %v2869, 0.0
      %v2934 = vmax.f32 %v2870, 0.0
      %v2935 = vmax.f32 %v2871, 0.0
      %v2936 = vmax.f32 %v2872, 0.0
      %v2937 = vmax.f32 %v2873, 0.0
      %v2938 = vmax.f32 %v2874, 0.0
      %v2939 = vmax.f32 %v2875, 0.0
      %2942 = vrot.lane.b32.xlu0 %v2337, 16
      %v2943 = vpop.permute.xlu0 %2942
      %2944 = vrot.lane.b32.xlu0 %v2352, 16
      %v2945 = vpop.permute.xlu0 %2944
      %2948 = vrot.lane.b32.xlu0 %v2337, 32
      %v2949 = vpop.permute.xlu0 %2948
      %2950 = vrot.lane.b32.xlu0 %v2352, 32
      %v2951 = vpop.permute.xlu0 %2950
      %2954 = vrot.lane.b32.xlu0 %v2337, 48
      %v2955 = vpop.permute.xlu0 %2954
      %2956 = vrot.lane.b32.xlu0 %v2352, 48
      %v2957 = vpop.permute.xlu0 %2956
      %2960 = vrot.lane.b32.xlu0 %v2337, 64
      %v2961 = vpop.permute.xlu0 %2960
      %2962 = vrot.lane.b32.xlu0 %v2352, 64
      %v2963 = vpop.permute.xlu0 %2962
      %2966 = vrot.lane.b32.xlu0 %v2337, 80
      %v2967 = vpop.permute.xlu0 %2966
      %2968 = vrot.lane.b32.xlu0 %v2352, 80
      %v2969 = vpop.permute.xlu0 %2968
      %2972 = vrot.lane.b32.xlu0 %v2337, 96
      %v2973 = vpop.permute.xlu0 %2972
      %2974 = vrot.lane.b32.xlu0 %v2352, 96
      %v2975 = vpop.permute.xlu0 %2974
      %2978 = vrot.lane.b32.xlu0 %v2337, 112
      %v2979 = vpop.permute.xlu0 %2978
      %2980 = vrot.lane.b32.xlu0 %v2352, 112
      %v2981 = vpop.permute.xlu0 %2980
      %v2984 = vsel %vm957, %v2337, %v2943
      %v2985 = vsel %vm957, %v2352, %v2945
      %v2986 = vsel %vm960, %v2984, %v2949
      %v2987 = vsel %vm960, %v2985, %v2951
      %v2988 = vsel %vm963, %v2986, %v2955
      %v2989 = vsel %vm963, %v2987, %v2957
      %v2990 = vsel %vm966, %v2988, %v2961
      %v2991 = vsel %vm966, %v2989, %v2963
      %v2992 = vsel %vm969, %v2990, %v2967
      %v2993 = vsel %vm969, %v2991, %v2969
      %v2994 = vsel %vm972, %v2992, %v2973
      %v2995 = vsel %vm972, %v2993, %v2975
      %v2996 = vsel %vm975, %v2994, %v2979
      %v2997 = vsel %vm975, %v2995, %v2981
      %v3000 = vrot.slane %v2996, 7
      %v3001 = vrot.slane %v2997, 7
      %v3002 = vsel %vm982, %v2996, %v3000
      %v3003 = vsel %vm984, %v2996, %v3000
      %v3004 = vrot.slane %v3003, 1
      %v3005 = vsel %vm987, %v2996, %v3000
      %v3006 = vrot.slane %v3005, 2
      %v3007 = vsel %vm990, %v2996, %v3000
      %v3008 = vrot.slane %v3007, 3
      %v3009 = vsel %vm993, %v2996, %v3000
      %v3010 = vrot.slane %v3009, 4
      %v3011 = vsel %vm996, %v2996, %v3000
      %v3012 = vrot.slane %v3011, 5
      %v3013 = vsel %vm999, %v2996, %v3000
      %v3014 = vrot.slane %v3013, 6
      %v3015 = vsel %vm1002, %v3000, %v2996
      %v3016 = vrot.slane %v3015, 7
      %v3017 = vsel %vm982, %v2997, %v3001
      %v3018 = vsel %vm984, %v2997, %v3001
      %v3019 = vrot.slane %v3018, 1
      %v3020 = vsel %vm987, %v2997, %v3001
      %v3021 = vrot.slane %v3020, 2
      %v3022 = vsel %vm990, %v2997, %v3001
      %v3023 = vrot.slane %v3022, 3
      %v3024 = vsel %vm993, %v2997, %v3001
      %v3025 = vrot.slane %v3024, 4
      %v3026 = vsel %vm996, %v2997, %v3001
      %v3027 = vrot.slane %v3026, 5
      %v3028 = vsel %vm999, %v2997, %v3001
      %v3029 = vrot.slane %v3028, 6
      %v3030 = vsel %vm1002, %v3001, %v2997
      %v3031 = vrot.slane %v3030, 7
      %v3032 = vperm.slane %v3002, 0
      %v3033 = vperm.slane %v3002, 1
      %v3034 = vperm.slane %v3004, 0
      %v3035 = vperm.slane %v3004, 1
      %v3036 = vperm.slane %v3006, 0
      %v3037 = vperm.slane %v3006, 1
      %v3038 = vperm.slane %v3008, 0
      %v3039 = vperm.slane %v3008, 1
      %v3040 = vperm.slane %v3010, 0
      %v3041 = vperm.slane %v3010, 1
      %v3042 = vperm.slane %v3012, 0
      %v3043 = vperm.slane %v3012, 1
      %v3044 = vperm.slane %v3014, 0
      %v3045 = vperm.slane %v3014, 1
      %v3046 = vperm.slane %v3016, 0
      %v3047 = vperm.slane %v3016, 1
      %v3048 = vperm.slane %v3017, 0
      %v3049 = vperm.slane %v3017, 1
      %v3050 = vperm.slane %v3019, 0
      %v3051 = vperm.slane %v3019, 1
      %v3052 = vperm.slane %v3021, 0
      %v3053 = vperm.slane %v3021, 1
      %v3054 = vperm.slane %v3023, 0
      %v3055 = vperm.slane %v3023, 1
      %v3056 = vperm.slane %v3025, 0
      %v3057 = vperm.slane %v3025, 1
      %v3058 = vperm.slane %v3027, 0
      %v3059 = vperm.slane %v3027, 1
      %v3060 = vperm.slane %v3029, 0
      %v3061 = vperm.slane %v3029, 1
      %v3062 = vperm.slane %v3031, 0
      %v3063 = vperm.slane %v3031, 1
      %v3096 = vmul.f32 %v2876, %v3032
      %v3097 = vmul.f32 %v2877, %v3033
      %v3098 = vmul.f32 %v2878, %v3032
      %v3099 = vmul.f32 %v2879, %v3033
      %v3100 = vmul.f32 %v2880, %v3034
      %v3101 = vmul.f32 %v2881, %v3035
      %v3102 = vmul.f32 %v2882, %v3034
      %v3103 = vmul.f32 %v2883, %v3035
      %v3104 = vmul.f32 %v2884, %v3036
      %v3105 = vmul.f32 %v2885, %v3037
      %v3106 = vmul.f32 %v2886, %v3036
      %v3107 = vmul.f32 %v2887, %v3037
      %v3108 = vmul.f32 %v2888, %v3038
      %v3109 = vmul.f32 %v2889, %v3039
      %v3110 = vmul.f32 %v2890, %v3038
      %v3111 = vmul.f32 %v2891, %v3039
      %v3112 = vmul.f32 %v2892, %v3040
      %v3113 = vmul.f32 %v2893, %v3041
      %v3114 = vmul.f32 %v2894, %v3040
      %v3115 = vmul.f32 %v2895, %v3041
      %v3116 = vmul.f32 %v2896, %v3042
      %v3117 = vmul.f32 %v2897, %v3043
      %v3118 = vmul.f32 %v2898, %v3042
      %v3119 = vmul.f32 %v2899, %v3043
      %v3120 = vmul.f32 %v2900, %v3044
      %v3121 = vmul.f32 %v2901, %v3045
      %v3122 = vmul.f32 %v2902, %v3044
      %v3123 = vmul.f32 %v2903, %v3045
      %v3124 = vmul.f32 %v2904, %v3046
      %v3125 = vmul.f32 %v2905, %v3047
      %v3126 = vmul.f32 %v2906, %v3046
      %v3127 = vmul.f32 %v2907, %v3047
      %v3128 = vmul.f32 %v2908, %v3048
      %v3129 = vmul.f32 %v2909, %v3049
      %v3130 = vmul.f32 %v2910, %v3048
      %v3131 = vmul.f32 %v2911, %v3049
      %v3132 = vmul.f32 %v2912, %v3050
      %v3133 = vmul.f32 %v2913, %v3051
      %v3134 = vmul.f32 %v2914, %v3050
      %v3135 = vmul.f32 %v2915, %v3051
      %v3136 = vmul.f32 %v2916, %v3052
      %v3137 = vmul.f32 %v2917, %v3053
      %v3138 = vmul.f32 %v2918, %v3052
      %v3139 = vmul.f32 %v2919, %v3053
      %v3140 = vmul.f32 %v2920, %v3054
      %v3141 = vmul.f32 %v2921, %v3055
      %v3142 = vmul.f32 %v2922, %v3054
      %v3143 = vmul.f32 %v2923, %v3055
      %v3144 = vmul.f32 %v2924, %v3056
      %v3145 = vmul.f32 %v2925, %v3057
      %v3146 = vmul.f32 %v2926, %v3056
      %v3147 = vmul.f32 %v2927, %v3057
      %v3148 = vmul.f32 %v2928, %v3058
      %v3149 = vmul.f32 %v2929, %v3059
      %v3150 = vmul.f32 %v2930, %v3058
      %v3151 = vmul.f32 %v2931, %v3059
      %v3152 = vmul.f32 %v2932, %v3060
      %v3153 = vmul.f32 %v2933, %v3061
      %v3154 = vmul.f32 %v2934, %v3060
      %v3155 = vmul.f32 %v2935, %v3061
      %v3156 = vmul.f32 %v2936, %v3062
      %v3157 = vmul.f32 %v2937, %v3063
      %v3158 = vmul.f32 %v2938, %v3062
      %v3159 = vmul.f32 %v2939, %v3063
      %v3160 = vadd.f32 %v3096, %v3100
      %v3161 = vadd.f32 %v3160, %v3104
      %v3162 = vadd.f32 %v3161, %v3108
      %v3163 = vadd.f32 %v3162, %v3112
      %v3164 = vadd.f32 %v3163, %v3116
      %v3165 = vadd.f32 %v3164, %v3120
      %v3166 = vadd.f32 %v3165, %v3124
      %v3167 = vadd.f32 %v3166, %v3128
      %v3168 = vadd.f32 %v3167, %v3132
      %v3169 = vadd.f32 %v3168, %v3136
      %v3170 = vadd.f32 %v3169, %v3140
      %v3171 = vadd.f32 %v3170, %v3144
      %v3172 = vadd.f32 %v3171, %v3148
      %v3173 = vadd.f32 %v3172, %v3152
      %v3174 = vadd.f32 %v3173, %v3156
      %v3175 = vadd.f32 %v3097, %v3101
      %v3176 = vadd.f32 %v3175, %v3105
      %v3177 = vadd.f32 %v3176, %v3109
      %v3178 = vadd.f32 %v3177, %v3113
      %v3179 = vadd.f32 %v3178, %v3117
      %v3180 = vadd.f32 %v3179, %v3121
      %v3181 = vadd.f32 %v3180, %v3125
      %v3182 = vadd.f32 %v3181, %v3129
      %v3183 = vadd.f32 %v3182, %v3133
      %v3184 = vadd.f32 %v3183, %v3137
      %v3185 = vadd.f32 %v3184, %v3141
      %v3186 = vadd.f32 %v3185, %v3145
      %v3187 = vadd.f32 %v3186, %v3149
      %v3188 = vadd.f32 %v3187, %v3153
      %v3189 = vadd.f32 %v3188, %v3157
      %v3190 = vadd.f32 %v3098, %v3102
      %v3191 = vadd.f32 %v3190, %v3106
      %v3192 = vadd.f32 %v3191, %v3110
      %v3193 = vadd.f32 %v3192, %v3114
      %v3194 = vadd.f32 %v3193, %v3118
      %v3195 = vadd.f32 %v3194, %v3122
      %v3196 = vadd.f32 %v3195, %v3126
      %v3197 = vadd.f32 %v3196, %v3130
      %v3198 = vadd.f32 %v3197, %v3134
      %v3199 = vadd.f32 %v3198, %v3138
      %v3200 = vadd.f32 %v3199, %v3142
      %v3201 = vadd.f32 %v3200, %v3146
      %v3202 = vadd.f32 %v3201, %v3150
      %v3203 = vadd.f32 %v3202, %v3154
      %v3204 = vadd.f32 %v3203, %v3158
      %v3205 = vadd.f32 %v3099, %v3103
      %v3206 = vadd.f32 %v3205, %v3107
      %v3207 = vadd.f32 %v3206, %v3111
      %v3208 = vadd.f32 %v3207, %v3115
      %v3209 = vadd.f32 %v3208, %v3119
      %v3210 = vadd.f32 %v3209, %v3123
      %v3211 = vadd.f32 %v3210, %v3127
      %v3212 = vadd.f32 %v3211, %v3131
      %v3213 = vadd.f32 %v3212, %v3135
      %v3214 = vadd.f32 %v3213, %v3139
      %v3215 = vadd.f32 %v3214, %v3143
      %v3216 = vadd.f32 %v3215, %v3147
      %v3217 = vadd.f32 %v3216, %v3151
      %v3218 = vadd.f32 %v3217, %v3155
      %v3219 = vadd.f32 %v3218, %v3159
      %3220 = vmatpush.msra.mxu0 %v305
      %3221 = vmatpush.msra.mxu0 %v304
      %3222 = vmatpush.msra.mxu0 %v303
      %3223 = vmatpush.msra.mxu0 %v302
      %3224 = vmatpush.msra.mxu0 %v301
      %3225 = vmatpush.msra.mxu0 %v300
      %3226 = vmatpush.msra.mxu0 %v299
      %3227 = vmatpush.msra.mxu0 %v298
      %3228 = vmatpush.msra.mxu0 %v297
      %3229 = vmatpush.msra.mxu0 %v296
      %3230 = vmatpush.msra.mxu0 %v295
      %3231 = vmatpush.msra.mxu0 %v294
      %3232 = vmatpush.msra.mxu0 %v293
      %3233 = vmatpush.msra.mxu0 %v292
      %3234 = vmatpush.msra.mxu0 %v291
      %3235 = vmatpush.msra.mxu0 %v290
      %3236 = vmatmul.f32.gmra.mxu0 %v3174
      %v3237 = vpop.f32.mrf.mxu0
      %v3238 = vadd.f32 0.0, %v3237
      %3239 = vmatmul.f32.gmra.mxu0 %v3204
      %v3240 = vpop.f32.mrf.mxu0
      %v3241 = vadd.f32 0.0, %v3240
      %3242 = vdwg.mxu0
      %3243 = vmatpush.msra.mxu0 %v321
      %3244 = vmatpush.msra.mxu0 %v320
      %3245 = vmatpush.msra.mxu0 %v319
      %3246 = vmatpush.msra.mxu0 %v318
      %3247 = vmatpush.msra.mxu0 %v317
      %3248 = vmatpush.msra.mxu0 %v316
      %3249 = vmatpush.msra.mxu0 %v315
      %3250 = vmatpush.msra.mxu0 %v314
      %3251 = vmatpush.msra.mxu0 %v313
      %3252 = vmatpush.msra.mxu0 %v312
      %3253 = vmatpush.msra.mxu0 %v311
      %3254 = vmatpush.msra.mxu0 %v310
      %3255 = vmatpush.msra.mxu0 %v309
      %3256 = vmatpush.msra.mxu0 %v308
      %3257 = vmatpush.msra.mxu0 %v307
      %3258 = vmatpush.msra.mxu0 %v306
      %3259 = vmatmul.f32.gmra.mxu0 %v3189
      %v3260 = vpop.f32.mrf.mxu0
      %v3261 = vadd.f32 %v3238, %v3260
      %3262 = vmatmul.f32.gmra.mxu0 %v3219
      %v3263 = vpop.f32.mrf.mxu0
      %v3264 = vadd.f32 %v3241, %v3263
      %3265 = vdwg.mxu0
      %v3267 = vsel %vm957, %v2420, 0
      %v3270 = vsel %vm957, %v2421, 0
      %3272 = vmatpush.msra.mxu0 0.0
      %3273 = vmatpush.msra.mxu0 0.0
      %3274 = vmatpush.msra.mxu0 0.0
      %3275 = vmatpush.msra.mxu0 0.0
      %3276 = vmatpush.msra.mxu0 0.0
      %3277 = vmatpush.msra.mxu0 0.0
      %3278 = vmatpush.msra.mxu0 0.0
      %3279 = vmatpush.msra.mxu0 0.0
      %3280 = vmatpush.msra.mxu0 0.0
      %3281 = vmatpush.msra.mxu0 0.0
      %3282 = vmatpush.msra.mxu0 0.0
      %3283 = vmatpush.msra.mxu0 0.0
      %3284 = vmatpush.msra.mxu0 0.0
      %3285 = vmatpush.msra.mxu0 0.0
      %3286 = vmatpush.msra.mxu0 %v2352
      %3287 = vmatpush.msra.mxu0 %v2337
      %3288 = vmatmul.f32.gmra.mxu0 %v3267
      %v3289 = vpop.f32.mrf.mxu0
      %v3290 = vadd.f32 0.0, %v3289
      %3291 = vmatmul.f32.gmra.mxu0 %v3270
      %v3292 = vpop.f32.mrf.mxu0
      %v3293 = vadd.f32 0.0, %v3292
      %3294 = vdwg.mxu0
      %3296 = vset.pattern.permute.xlu0 0
      %3297 = vperm.xlu0 %3296, %v2423
      %v3298 = vpop.permute.xlu0 %3297
      %3301 = vset.pattern.permute.xlu0 0
      %3302 = vperm.xlu0 %3301, %v2424
      %v3303 = vpop.permute.xlu0 %3302
      %v3305 = vmul.f32 %v3261, %v3298
      %v3306 = vmul.f32 %v3264, %v3303
      %v3307 = vadd.f32 %v3305, %v3290
      %v3308 = vadd.f32 %v3306, %v3293
      %3310 = vset.pattern.permute.xlu0 0
      %3311 = vperm.xlu0 %3310, %v2426
      %v3312 = vpop.permute.xlu0 %3311
      %3315 = vset.pattern.permute.xlu0 0
      %3316 = vperm.xlu0 %3315, %v2427
      %v3317 = vpop.permute.xlu0 %3316
      %v3319 = vadd.f32 %v3307, %v3312
      %v3320 = vadd.f32 %v3308, %v3317
      %v3321 = vxor.u32 %v3319, 2147483648
      %v3322 = vxor.u32 %v3320, 2147483648
      %v3323 = vmul.f32 %v3321, 1.442695
      %v3324 = vpow.pop %v3323
      %v3325 = vmul.f32 %v3322, 1.442695
      %v3326 = vpow.pop %v3325
      %v3327 = vadd.f32 %v3324, 1.0
      %v3328 = vadd.f32 %v3326, 1.0
      %v3329 = vrcp.pop %v3327
      %v3330 = vmul.f32 %v3327, %v3329
      %v3331 = vsub.f32 1.0, %v3330
      %v3332 = vmul.f32 %v3329, %v3331
      %v3333 = vadd.f32 %v3329, %v3332
      %vm3334 = vweird.f32 %v3327
      %vm3335 = vweird.f32 %v3329
      %vm3336 = vmor %vm3334, %vm3335
      %v3337 = vsel %vm3336, %v3329, %v3333
      %v3338 = vand.u32 2147483647, %v3327
      %vm3339 = vcmp.eq.f32.partialorder %v3338, 8.507059e+37
      %v3340 = vand.u32 %v3327, 2147483648
      %v3341 = vor.u32 1.1754944e-38, %v3340
      %v3342 = vsel %vm3339, %v3341, %v3337
      %v3343 = vmul.f32 1.0, %v3342
      %v3344 = vrcp.pop %v3328
      %v3345 = vmul.f32 %v3328, %v3344
      %v3346 = vsub.f32 1.0, %v3345
      %v3347 = vmul.f32 %v3344, %v3346
      %v3348 = vadd.f32 %v3344, %v3347
      %vm3349 = vweird.f32 %v3328
      %vm3350 = vweird.f32 %v3344
      %vm3351 = vmor %vm3349, %vm3350
      %v3352 = vsel %vm3351, %v3344, %v3348
      %v3353 = vand.u32 2147483647, %v3328
      %vm3354 = vcmp.eq.f32.partialorder %v3353, 8.507059e+37
      %v3355 = vand.u32 %v3328, 2147483648
      %v3356 = vor.u32 1.1754944e-38, %v3355
      %v3357 = vsel %vm3354, %v3356, %v3352
      %v3358 = vmul.f32 1.0, %v3357
      %v3359 = vadd.f32 %v3343, %v1331
      %v3360 = vadd.f32 %v3358, %v1346
      %v3361 = vmul.f32 %v3359, 0.5
      %v3362 = vmul.f32 %v3360, 0.5
      %3363 = vst.msk [vmem:[%s288] sm:$0xff] %vm957, %v3361
      %3364 = vst.msk [vmem:[%s288 + $0x8] sm:$0xff] %vm957, %v3362
      %p3365 = scmp.lt.s32.totalorder %s17, 3
      %s3366 = scalar_select %p3365, %s17, 3
      %s3367 = smul.addr %s3366, 2
      %s3368 = smul.addr %s3367, 8
      %s3369 = scalar_lea.vmem %s6, %s3368
      // Predicated region
      $region45: #{aligner_forward.1} parent=43 // pred_check
        %p3370 = pneg %p176
      $region46: #{aligner_forward.1} parent=43 // pred_check_branch
        %3372 = sbr.rel (%p3370) target = $region48
      $region47: #{aligner_forward.1} parent=43 // pred_region
        _
      $region48: #{aligner_forward.1} parent=43 // pred_fallthru
        _
    $region44: #{aligner_forward.1} parent=5 // pred_fallthru
      _
    %p3373 = scmp.le.s32.totalorder 2, %s12
    // Predicated region
    $region49: #{aligner_forward.1} parent=5 // pred_check
      %p3374 = pneg %p3373
    $region50: #{aligner_forward.1} parent=5 // pred_check_branch
      %3376 = sbr.rel (%p3374) target = $region52
    $region51: #{aligner_forward.1} parent=5 // pred_region
      %s3377 = ssub.s32 %s12, 2
      // Predicated region
      $region53: #{aligner_forward.1} parent=51 // pred_check
        %p3378 = pneg %p182
      $region54: #{aligner_forward.1} parent=51 // pred_check_branch
        %3380 = sbr.rel (%p3378) target = $region56
      $region55: #{aligner_forward.1} parent=51 // pred_region
        %p3381 = scmp.lt.s32.totalorder %s18, 3
        %s3382 = scalar_select %p3381, %s18, 3
        %s3383 = smul.addr %s3382, 2
        %s3384 = smul.addr %s3383, 8
        %s3385 = scalar_lea.vmem %s6, %s3384
      $region56: #{aligner_forward.1} parent=51 // pred_fallthru
        _
    $region52: #{aligner_forward.1} parent=5 // pred_fallthru
      _
  $region6: #{aligner_forward.1} parent=0 // loop_footer
    %s16 = sadd.s32 1, %s12
  $region7: #{aligner_forward.1} parent=0 // loop_footer_branch
    %11 = sbr.rel target = $region3
  $region8: #{aligner_forward.1} parent=0 // loop_exit
    _

</llo_original>
